<compile_context>
chip_gen: v5e
topology: v5e:2x2
jax: 0.10.0
libtpu: 0.0.40
codegen_flags: <defaults>
</compile_context>

<pallas_src>
import functools

import jax
import jax.numpy as jnp
from jax.experimental import pallas as pl
from jax.experimental.pallas import tpu as pltpu

LANE = 128


def _round_up(x, m):
    return ((x + m - 1) // m) * m


def _pick_tile(n_pad, candidates):
    for c in candidates:
        if n_pad % c == 0:
            return c
    return LANE


def _clamp_vmem(need_bytes):
    # 2x headroom, floored at the v5e scoped default, capped below v7x VMEM.
    return int(min(max(2 * need_bytes, 16 * 1024 * 1024), 48 * 1024 * 1024))


# ---------------------------------------------------------------------------
# Kernels
# ---------------------------------------------------------------------------

def _project_kernel(x_ref, w_ref, o_ref):
    """Dense feature projection  o = x @ w  (bf16 MXU operands, f32 accum)."""
    o_ref[...] = jnp.dot(x_ref[...], w_ref[...],
                         preferred_element_type=jnp.float32).astype(o_ref.dtype)


def _aggregate_kernel(a_ref, z_ref, b_ref, o_ref, acc_ref, *, apply_relu):
    """One (row-tile i, col-tile k) step of  out = act(A_hat @ Z + b)."""
    k = pl.program_id(1)

    @pl.when(k == 0)
    def _init():
        acc_ref[...] = jnp.zeros_like(acc_ref)

    acc_ref[...] += jnp.dot(a_ref[...], z_ref[...],
                            preferred_element_type=jnp.float32)

    @pl.when(k == pl.num_programs(1) - 1)
    def _finalize():
        h = acc_ref[...] + b_ref[...]        # bias added once (finalize only)
        if apply_relu:
            h = jnp.maximum(h, 0.0)
        o_ref[...] = h.astype(o_ref.dtype)


# ---------------------------------------------------------------------------
# pallas_call wrappers
# ---------------------------------------------------------------------------

def _project(x, w, *, tile_m, out_dtype):
    n_pad, fin = x.shape
    fout = w.shape[1]
    grid = (n_pad // tile_m,)

    need = (2 * tile_m * fin * 2          # X tiles (bf16, double-buffered)
            + 2 * fin * fout * 2          # W (bf16)
            + 2 * tile_m * fout * jnp.dtype(out_dtype).itemsize)
    flops = 2 * n_pad * fin * fout
    bytes_accessed = (n_pad * fin * 2 + fin * fout * 2
                      + n_pad * fout * jnp.dtype(out_dtype).itemsize)

    return pl.pallas_call(
        _project_kernel,
        out_shape=jax.ShapeDtypeStruct((n_pad, fout), out_dtype),
        grid_spec=pltpu.PrefetchScalarGridSpec(
            num_scalar_prefetch=0,
            grid=grid,
            in_specs=[
                pl.BlockSpec((tile_m, fin), lambda i: (i, 0)),
                pl.BlockSpec((fin, fout), lambda i: (0, 0)),
            ],
            out_specs=pl.BlockSpec((tile_m, fout), lambda i: (i, 0))),
        compiler_params=pltpu.CompilerParams(
            dimension_semantics=("parallel",),
            vmem_limit_bytes=_clamp_vmem(need)),
        cost_estimate=pl.CostEstimate(flops=int(flops), transcendentals=0,
                                      bytes_accessed=int(bytes_accessed)),
    )(x, w)


def _aggregate(a, z, b, *, tile_m, tile_k, apply_relu, out_dtype):
    n_pad = a.shape[0]
    fout = z.shape[1]
    grid = (n_pad // tile_m, n_pad // tile_k)

    need = (2 * tile_m * tile_k * 2                       # A_hat tiles (bf16)
            + 2 * tile_k * fout * 2                       # Z tiles (bf16)
            + 2 * tile_m * fout * jnp.dtype(out_dtype).itemsize
            + tile_m * fout * 4                           # f32 accumulator
            + 2 * fout * 4)                               # bias
    flops = 2 * n_pad * n_pad * fout
    bytes_accessed = (n_pad * n_pad * 2                       # A_hat (bf16)
                      + (n_pad // tile_m) * n_pad * fout * 2  # Z re-streamed
                      + n_pad * fout * jnp.dtype(out_dtype).itemsize)

    kernel = functools.partial(_aggregate_kernel, apply_relu=apply_relu)
    return pl.pallas_call(
        kernel,
        out_shape=jax.ShapeDtypeStruct((n_pad, fout), out_dtype),
        grid_spec=pltpu.PrefetchScalarGridSpec(
            num_scalar_prefetch=0,
            grid=grid,
            in_specs=[
                pl.BlockSpec((tile_m, tile_k), lambda i, k: (i, k)),  # A_hat
                pl.BlockSpec((tile_k, fout), lambda i, k: (k, 0)),    # Z
                pl.BlockSpec((1, fout), lambda i, k: (0, 0)),         # bias
            ],
            out_specs=pl.BlockSpec((tile_m, fout), lambda i, k: (i, 0)),
            scratch_shapes=[pltpu.VMEM((tile_m, fout), jnp.float32)]),
        compiler_params=pltpu.CompilerParams(
            dimension_semantics=("parallel", "arbitrary"),
            vmem_limit_bytes=_clamp_vmem(need)),
        cost_estimate=pl.CostEstimate(flops=int(flops), transcendentals=0,
                                      bytes_accessed=int(bytes_accessed)),
    )(a, z, b)


# ---------------------------------------------------------------------------
# Full encoder (padding / casting glue in plain JAX, matmuls in Pallas)
# ---------------------------------------------------------------------------

def gcn_encoder(a_hat, x, w1, b1, w2, b2):
    n = x.shape[0]
    fin, hid = w1.shape
    out_c = w2.shape[1]

    n_pad = _round_up(n, LANE)
    fin_p = _round_up(fin, LANE)
    hid_p = _round_up(hid, LANE)
    out_p = _round_up(out_c, LANE)

    # 128-aligned tiles work on v5e; bump when the padded node dim allows it
    # (keeps >= 2 row tiles when possible so the "parallel" axis has work for
    # both cores on multi-TC chips).
    tile_m = _pick_tile(n_pad, (256, 128)) if n_pad >= 256 else LANE
    tile_k = _pick_tile(n_pad, (512, 256, 128))

    mxu = jnp.bfloat16  # MXU operand dtype; accumulation stays f32

    a_p = jnp.pad(a_hat, ((0, n_pad - n), (0, n_pad - n))).astype(mxu)
    x_p = jnp.pad(x, ((0, n_pad - n), (0, fin_p - fin))).astype(mxu)
    w1_p = jnp.pad(w1, ((0, fin_p - fin), (0, hid_p - hid))).astype(mxu)
    w2_p = jnp.pad(w2, ((0, hid_p - hid), (0, out_p - out_c))).astype(mxu)
    b1_p = jnp.pad(b1.reshape(1, hid), ((0, 0), (0, hid_p - hid))).astype(jnp.float32)
    b2_p = jnp.pad(b2.reshape(1, out_c), ((0, 0), (0, out_p - out_c))).astype(jnp.float32)

    # conv1: relu(A_hat @ (X @ W1) + b1)
    z1 = _project(x_p, w1_p, tile_m=tile_m, out_dtype=mxu)
    h = _aggregate(a_p, z1, b1_p, tile_m=tile_m, tile_k=tile_k,
                   apply_relu=True, out_dtype=mxu)

    # conv2: A_hat @ (H @ W2) + b2
    z2 = _project(h, w2_p, tile_m=tile_m, out_dtype=mxu)
    out = _aggregate(a_p, z2, b2_p, tile_m=tile_m, tile_k=tile_k,
                     apply_relu=False, out_dtype=jnp.float32)

    return out[:n, :out_c]


def build_normalized_adjacency(edge_index, num_nodes):
    """Dense A_hat = D^{-1/2} (A + I) D^{-1/2}, matching PyG gcn_norm:
    duplicate (non-self) edges accumulate via scatter-add; exactly one
    weight-1 self-loop per node (add_remaining_self_loops semantics)."""
    src, dst = edge_index[0], edge_index[1]
    not_self = (src != dst).astype(jnp.float32)
    a = jnp.zeros((num_nodes, num_nodes), jnp.float32)
    a = a.at[dst, src].add(not_self)                 # message flows src -> dst
    a = a + jnp.eye(num_nodes, dtype=jnp.float32)    # one self-loop per node
    deg = a.sum(axis=1)                              # in-degree incl. self-loop
    dinv = jnp.where(deg > 0, jax.lax.rsqrt(deg), 0.0)
    return dinv[:, None] * a * dinv[None, :]


if __name__ == "__main__":
    key = jax.random.PRNGKey(0)
    k_x, k_e, k_w1, k_w2 = jax.random.split(key, 4)

    num_nodes = 300            # pads to 384 -> exercises a real (3, 3) grid
    in_channels = 16
    out_channels = 2
    hidden = 2 * out_channels  # conv1 output width

    x = jax.random.normal(k_x, (num_nodes, in_channels), jnp.float32)
    num_edges = 900
    edge_index = jax.random.randint(k_e, (2, num_edges), 0, num_nodes, jnp.int32)

    def glorot(k, shape):
        lim = (6.0 / (shape[0] + shape[1])) ** 0.5
        return jax.random.uniform(k, shape, jnp.float32, -lim, lim)

    w1 = glorot(k_w1, (in_channels, hidden))
    b1 = jnp.zeros((1, hidden), jnp.float32)
    w2 = glorot(k_w2, (hidden, out_channels))
    b2 = jnp.zeros((1, out_channels), jnp.float32)

    a_hat = build_normalized_adjacency(edge_index, num_nodes)

    out = jax.jit(gcn_encoder)(a_hat, x, w1, b1, w2, b2)
    out = jax.block_until_ready(out)
    assert out.shape == (num_nodes, out_channels)

    # Reference 1: mirror the kernel's bf16 MXU-operand precision (tight).
    def q(v):
        return v.astype(jnp.bfloat16).astype(jnp.float32)

    z1_q = q(q(x) @ q(w1))
    h_q = q(jnp.maximum(q(a_hat) @ z1_q + b1, 0.0))
    z2_q = q(h_q @ q(w2))
    ref_q = q(a_hat) @ z2_q + b2
    assert jnp.allclose(out, ref_q, atol=1e-2, rtol=1e-2), (
        f"max err vs bf16-matched ref: {jnp.max(jnp.abs(out - ref_q))}")

    # Reference 2: pure-f32 module semantics (loose, bf16 operand rounding).
    h_ref = jnp.maximum(a_hat @ (x @ w1) + b1, 0.0)
    ref = a_hat @ (h_ref @ w2) + b2
    assert jnp.allclose(out, ref, atol=1e-1, rtol=1e-1), (
        f"max err vs f32 ref: {jnp.max(jnp.abs(out - ref))}")

    print("KERNEL_OK")
</pallas_src>

<mosaic_0001>
module attributes {stable_mosaic.version = 11 : i64} {
  func.func @_project_kernel(%arg0: i32, %arg1: memref<128x128xbf16, #tpu.memory_space<vmem>>, %arg2: memref<128x128xbf16, #tpu.memory_space<vmem>>, %arg3: memref<128x128xbf16, #tpu.memory_space<vmem>>) attributes {dimension_semantics = [#tpu.dimension_semantics<parallel>], iteration_bounds = array<i64: 3>, scalar_prefetch = 0 : i64, scratch_operands = 0 : i64, tpu.core_type = #tpu.core_type<tc>, window_params = [{transform_indices = @transform_0, window_bounds = array<i64: 128, 128>}, {pipeline_mode = #tpu.pipeline_mode<synchronous>, transform_indices = @transform_1, window_bounds = array<i64: 128, 128>}, {transform_indices = @transform_2, window_bounds = array<i64: 128, 128>}]} {
    %c0 = arith.constant 0 : index
    %c0_0 = arith.constant 0 : index
    %0 = vector.load %arg1[%c0, %c0_0] : memref<128x128xbf16, #tpu.memory_space<vmem>>, vector<128x128xbf16>
    %c0_1 = arith.constant 0 : index
    %c0_2 = arith.constant 0 : index
    %1 = vector.load %arg2[%c0_1, %c0_2] : memref<128x128xbf16, #tpu.memory_space<vmem>>, vector<128x128xbf16>
    %cst = arith.constant dense<0.000000e+00> : vector<128x128xf32>
    %2 = tpu.matmul %0, %1, %cst {dimension_numbers = #tpu.dot_dimension_numbers<[1], [0], [0], [1], [0, 0, 1, 1], [], []>} : vector<128x128xbf16>, vector<128x128xbf16>, vector<128x128xf32> -> vector<128x128xf32>
    %3 = arith.truncf %2 : vector<128x128xf32> to vector<128x128xbf16>
    %c0_3 = arith.constant 0 : index
    %c0_4 = arith.constant 0 : index
    %4 = vector.load %arg3[%c0_3, %c0_4] : memref<128x128xbf16, #tpu.memory_space<vmem>>, vector<128x128xbf16>
    tpu.vector_store %arg3[%c0_3, %c0_4], %3 {strides = array<i32>} : memref<128x128xbf16, #tpu.memory_space<vmem>>, vector<128x128xbf16>,
    return
  }
  func.func @transform_0(%arg0: i32) -> (i32, i32) {
    %c0_i32 = arith.constant 0 : i32
    %c0_i32_0 = arith.constant 0 : i32
    return %arg0, %c0_i32 : i32, i32
  }
  func.func @transform_1(%arg0: i32) -> (i32, i32) {
    %c0_i32 = arith.constant 0 : i32
    %c0_i32_0 = arith.constant 0 : i32
    %c0_i32_1 = arith.constant 0 : i32
    return %c0_i32, %c0_i32_0 : i32, i32
  }
  func.func @transform_2(%arg0: i32) -> (i32, i32) {
    %c0_i32 = arith.constant 0 : i32
    %c0_i32_0 = arith.constant 0 : i32
    return %arg0, %c0_i32 : i32, i32
  }
}

module attributes {stable_mosaic.version = 11 : i64} {
  func.func @_aggregate_kernel(%arg0: i32, %arg1: i32, %arg2: memref<128x128xbf16, #tpu.memory_space<vmem>>, %arg3: memref<128x128xbf16, #tpu.memory_space<vmem>>, %arg4: memref<1x128xf32, #tpu.memory_space<vmem>>, %arg5: memref<128x128xbf16, #tpu.memory_space<vmem>>, %arg6: memref<128x128xf32, #tpu.memory_space<vmem>>) attributes {dimension_semantics = [#tpu.dimension_semantics<parallel>, #tpu.dimension_semantics<arbitrary>], iteration_bounds = array<i64: 3, 3>, scalar_prefetch = 0 : i64, scratch_operands = 1 : i64, tpu.core_type = #tpu.core_type<tc>, window_params = [{transform_indices = @transform_0, window_bounds = array<i64: 128, 128>}, {transform_indices = @transform_1, window_bounds = array<i64: 128, 128>}, {pipeline_mode = #tpu.pipeline_mode<synchronous>, transform_indices = @transform_2, window_bounds = array<i64: 1, 128>}, {transform_indices = @transform_3, window_bounds = array<i64: 128, 128>}]} {
    %c0_i32 = arith.constant 0 : i32
    %0 = arith.cmpi eq, %arg1, %c0_i32 : i32
    %1 = arith.extui %0 : i1 to i32
    %c0_i32_0 = arith.constant 0 : i32
    %2 = arith.cmpi ne, %1, %c0_i32_0 : i32
    scf.if %2 {
      %cst_9 = arith.constant 0.000000e+00 : f32
      %12 = vector.broadcast %cst_9 : f32 to vector<128x128xf32>
      %c0_10 = arith.constant 0 : index
      %c0_11 = arith.constant 0 : index
      %13 = vector.load %arg6[%c0_10, %c0_11] : memref<128x128xf32, #tpu.memory_space<vmem>>, vector<128x128xf32>
      tpu.vector_store %arg6[%c0_10, %c0_11], %12 {strides = array<i32>} : memref<128x128xf32, #tpu.memory_space<vmem>>, vector<128x128xf32>,
    } else {
    }
    %c0 = arith.constant 0 : index
    %c0_1 = arith.constant 0 : index
    %3 = vector.load %arg6[%c0, %c0_1] : memref<128x128xf32, #tpu.memory_space<vmem>>, vector<128x128xf32>
    %c0_2 = arith.constant 0 : index
    %c0_3 = arith.constant 0 : index
    %4 = vector.load %arg2[%c0_2, %c0_3] : memref<128x128xbf16, #tpu.memory_space<vmem>>, vector<128x128xbf16>
    %c0_4 = arith.constant 0 : index
    %c0_5 = arith.constant 0 : index
    %5 = vector.load %arg3[%c0_4, %c0_5] : memref<128x128xbf16, #tpu.memory_space<vmem>>, vector<128x128xbf16>
    %cst = arith.constant dense<0.000000e+00> : vector<128x128xf32>
    %6 = tpu.matmul %4, %5, %cst {dimension_numbers = #tpu.dot_dimension_numbers<[1], [0], [0], [1], [0, 0, 1, 1], [], []>} : vector<128x128xbf16>, vector<128x128xbf16>, vector<128x128xf32> -> vector<128x128xf32>
    %7 = arith.addf %3, %6 : vector<128x128xf32>
    %c0_6 = arith.constant 0 : index
    %c0_7 = arith.constant 0 : index
    %8 = vector.load %arg6[%c0_6, %c0_7] : memref<128x128xf32, #tpu.memory_space<vmem>>, vector<128x128xf32>
    tpu.vector_store %arg6[%c0_6, %c0_7], %7 {strides = array<i32>} : memref<128x128xf32, #tpu.memory_space<vmem>>, vector<128x128xf32>,
    %c2_i32 = arith.constant 2 : i32
    %9 = arith.cmpi eq, %arg1, %c2_i32 : i32
    %10 = arith.extui %9 : i1 to i32
    %c0_i32_8 = arith.constant 0 : i32
    %11 = arith.cmpi ne, %10, %c0_i32_8 : i32
    scf.if %11 {
      %c0_9 = arith.constant 0 : index
      %c0_10 = arith.constant 0 : index
      %12 = vector.load %arg6[%c0_9, %c0_10] : memref<128x128xf32, #tpu.memory_space<vmem>>, vector<128x128xf32>
      %c0_11 = arith.constant 0 : index
      %c0_12 = arith.constant 0 : index
      %13 = vector.load %arg4[%c0_11, %c0_12] : memref<1x128xf32, #tpu.memory_space<vmem>>, vector<1x128xf32>
      %14 = vector.broadcast %13 : vector<1x128xf32> to vector<128x128xf32>
      %15 = arith.addf %12, %14 : vector<128x128xf32>
      %cst_13 = arith.constant 0.000000e+00 : f32
      %16 = vector.broadcast %cst_13 : f32 to vector<128x128xf32>
      %17 = arith.maximumf %15, %16 : vector<128x128xf32>
      %18 = arith.truncf %17 : vector<128x128xf32> to vector<128x128xbf16>
      %c0_14 = arith.constant 0 : index
      %c0_15 = arith.constant 0 : index
      %19 = vector.load %arg5[%c0_14, %c0_15] : memref<128x128xbf16, #tpu.memory_space<vmem>>, vector<128x128xbf16>
      tpu.vector_store %arg5[%c0_14, %c0_15], %18 {strides = array<i32>} : memref<128x128xbf16, #tpu.memory_space<vmem>>, vector<128x128xbf16>,
    } else {
    }
    return
  }
  func.func @transform_0(%arg0: i32, %arg1: i32) -> (i32, i32) {
    %c0_i32 = arith.constant 0 : i32
    return %arg0, %arg1 : i32, i32
  }
  func.func @transform_1(%arg0: i32, %arg1: i32) -> (i32, i32) {
    %c0_i32 = arith.constant 0 : i32
    %c0_i32_0 = arith.constant 0 : i32
    return %arg1, %c0_i32 : i32, i32
  }
  func.func @transform_2(%arg0: i32, %arg1: i32) -> (i32, i32) {
    %c0_i32 = arith.constant 0 : i32
    %c0_i32_0 = arith.constant 0 : i32
    %c0_i32_1 = arith.constant 0 : i32
    return %c0_i32, %c0_i32_0 : i32, i32
  }
  func.func @transform_3(%arg0: i32, %arg1: i32) -> (i32, i32) {
    %c0_i32 = arith.constant 0 : i32
    %c0_i32_0 = arith.constant 0 : i32
    return %arg0, %c0_i32 : i32, i32
  }
}

module attributes {stable_mosaic.version = 11 : i64} {
  func.func @_aggregate_kernel(%arg0: i32, %arg1: i32, %arg2: memref<128x128xbf16, #tpu.memory_space<vmem>>, %arg3: memref<128x128xbf16, #tpu.memory_space<vmem>>, %arg4: memref<1x128xf32, #tpu.memory_space<vmem>>, %arg5: memref<128x128xf32, #tpu.memory_space<vmem>>, %arg6: memref<128x128xf32, #tpu.memory_space<vmem>>) attributes {dimension_semantics = [#tpu.dimension_semantics<parallel>, #tpu.dimension_semantics<arbitrary>], iteration_bounds = array<i64: 3, 3>, scalar_prefetch = 0 : i64, scratch_operands = 1 : i64, tpu.core_type = #tpu.core_type<tc>, window_params = [{transform_indices = @transform_0, window_bounds = array<i64: 128, 128>}, {transform_indices = @transform_1, window_bounds = array<i64: 128, 128>}, {pipeline_mode = #tpu.pipeline_mode<synchronous>, transform_indices = @transform_2, window_bounds = array<i64: 1, 128>}, {transform_indices = @transform_3, window_bounds = array<i64: 128, 128>}]} {
    %c0_i32 = arith.constant 0 : i32
    %0 = arith.cmpi eq, %arg1, %c0_i32 : i32
    %1 = arith.extui %0 : i1 to i32
    %c0_i32_0 = arith.constant 0 : i32
    %2 = arith.cmpi ne, %1, %c0_i32_0 : i32
    scf.if %2 {
      %cst_9 = arith.constant 0.000000e+00 : f32
      %12 = vector.broadcast %cst_9 : f32 to vector<128x128xf32>
      %c0_10 = arith.constant 0 : index
      %c0_11 = arith.constant 0 : index
      %13 = vector.load %arg6[%c0_10, %c0_11] : memref<128x128xf32, #tpu.memory_space<vmem>>, vector<128x128xf32>
      tpu.vector_store %arg6[%c0_10, %c0_11], %12 {strides = array<i32>} : memref<128x128xf32, #tpu.memory_space<vmem>>, vector<128x128xf32>,
    } else {
    }
    %c0 = arith.constant 0 : index
    %c0_1 = arith.constant 0 : index
    %3 = vector.load %arg6[%c0, %c0_1] : memref<128x128xf32, #tpu.memory_space<vmem>>, vector<128x128xf32>
    %c0_2 = arith.constant 0 : index
    %c0_3 = arith.constant 0 : index
    %4 = vector.load %arg2[%c0_2, %c0_3] : memref<128x128xbf16, #tpu.memory_space<vmem>>, vector<128x128xbf16>
    %c0_4 = arith.constant 0 : index
    %c0_5 = arith.constant 0 : index
    %5 = vector.load %arg3[%c0_4, %c0_5] : memref<128x128xbf16, #tpu.memory_space<vmem>>, vector<128x128xbf16>
    %cst = arith.constant dense<0.000000e+00> : vector<128x128xf32>
    %6 = tpu.matmul %4, %5, %cst {dimension_numbers = #tpu.dot_dimension_numbers<[1], [0], [0], [1], [0, 0, 1, 1], [], []>} : vector<128x128xbf16>, vector<128x128xbf16>, vector<128x128xf32> -> vector<128x128xf32>
    %7 = arith.addf %3, %6 : vector<128x128xf32>
    %c0_6 = arith.constant 0 : index
    %c0_7 = arith.constant 0 : index
    %8 = vector.load %arg6[%c0_6, %c0_7] : memref<128x128xf32, #tpu.memory_space<vmem>>, vector<128x128xf32>
    tpu.vector_store %arg6[%c0_6, %c0_7], %7 {strides = array<i32>} : memref<128x128xf32, #tpu.memory_space<vmem>>, vector<128x128xf32>,
    %c2_i32 = arith.constant 2 : i32
    %9 = arith.cmpi eq, %arg1, %c2_i32 : i32
    %10 = arith.extui %9 : i1 to i32
    %c0_i32_8 = arith.constant 0 : i32
    %11 = arith.cmpi ne, %10, %c0_i32_8 : i32
    scf.if %11 {
      %c0_9 = arith.constant 0 : index
      %c0_10 = arith.constant 0 : index
      %12 = vector.load %arg6[%c0_9, %c0_10] : memref<128x128xf32, #tpu.memory_space<vmem>>, vector<128x128xf32>
      %c0_11 = arith.constant 0 : index
      %c0_12 = arith.constant 0 : index
      %13 = vector.load %arg4[%c0_11, %c0_12] : memref<1x128xf32, #tpu.memory_space<vmem>>, vector<1x128xf32>
      %14 = vector.broadcast %13 : vector<1x128xf32> to vector<128x128xf32>
      %15 = arith.addf %12, %14 : vector<128x128xf32>
      %c0_13 = arith.constant 0 : index
      %c0_14 = arith.constant 0 : index
      %16 = vector.load %arg5[%c0_13, %c0_14] : memref<128x128xf32, #tpu.memory_space<vmem>>, vector<128x128xf32>
      tpu.vector_store %arg5[%c0_13, %c0_14], %15 {strides = array<i32>} : memref<128x128xf32, #tpu.memory_space<vmem>>, vector<128x128xf32>,
    } else {
    }
    return
  }
  func.func @transform_0(%arg0: i32, %arg1: i32) -> (i32, i32) {
    %c0_i32 = arith.constant 0 : i32
    return %arg0, %arg1 : i32, i32
  }
  func.func @transform_1(%arg0: i32, %arg1: i32) -> (i32, i32) {
    %c0_i32 = arith.constant 0 : i32
    %c0_i32_0 = arith.constant 0 : i32
    return %arg1, %c0_i32 : i32, i32
  }
  func.func @transform_2(%arg0: i32, %arg1: i32) -> (i32, i32) {
    %c0_i32 = arith.constant 0 : i32
    %c0_i32_0 = arith.constant 0 : i32
    %c0_i32_1 = arith.constant 0 : i32
    return %c0_i32, %c0_i32_0 : i32, i32
  }
  func.func @transform_3(%arg0: i32, %arg1: i32) -> (i32, i32) {
    %c0_i32 = arith.constant 0 : i32
    %c0_i32_0 = arith.constant 0 : i32
    return %arg0, %c0_i32 : i32, i32
  }
}

</mosaic_0001>

<llo_original>
// kernel: gcn_encoder.4
$region0: #{gcn_encoder.4}
  #allocation0 [shape = 'u32[]', space=smem, size = 0x4, offset = 0x4, fixed_abs, tag = 'smem constant byte address 0x4 - core index']
  #allocation1 [shape = 'u32[72,128]{1,0:T(1,128)}', space=vmem, size = 0x9000, scoped, tag = 'internal scratch']
  %s0 = inlined_call_operand.vmem [shape: bf16[384,128], index: 0, kind: input, shape index: {}]
  %s1 = inlined_call_operand.vmem [shape: bf16[128,128], index: 1, kind: input, shape index: {}]
  %s2 = inlined_call_operand.vmem [shape: bf16[384,128], index: 2, kind: output, shape index: {}]
  %s3 = sld [smem:[#allocation0]]
  $region41: #{gcn_encoder.4} parent=0
    _
  %s5 = ssub.s32 1, %s3
  %s6 = scalar_select 0, %s5, %s3
  loop: start=0, step=1, limit=5
  $region2: #{gcn_encoder.4} parent=0 // loop_pre_header
    _
  $region3: #{gcn_encoder.4} parent=0 // loop_header
    %s8 = sphi 0, %s12
    %p9 = scmp.ge.s32.totalorder %s8, 5
    %s18 = sphi 0, %s20
    %s21 = sphi 0, %s18
    %s22 = sphi 0, %s21
    %s38 = sphi 0, %s22
    %s42 = sphi 0, %s42
    %s44 = sphi 0, %s42
    %s45 = sphi 0, %s44
    %s59 = sphi 0, %s45
    %s65 = sphi 0, %s67
    %s68 = sphi 0, %s65
    %s69 = sphi 0, %s68
    %s85 = sphi 0, %s69
  $region4: #{gcn_encoder.4} parent=0 // loop_header_branch
    %11 = sbr.rel (%p9) target = $region8
  $region5: #{gcn_encoder.4} parent=0 // loop_body
    %s13 = ssub.s32 %s8, 1
    %s14 = ssub.s32 %s8, 2
    %s15 = sadd.s32 %s8, 1
    %s16 = ssub.s32 %s8, %s15
    %p17 = scmp.eq.s32.totalorder %s16, 0
    %s19 = sadd.s32 %s18, 1
    %s20 = scalar_select %p17, %s18, %s19
    %p23 = pneg %p17
    %p24 = scmp.eq.s32.totalorder %s8, 2
    %p25 = por %p23, %p24
    %p26 = scmp.ne.s32.totalorder %s18, %s21
    %p27 = scmp.eq.s32.totalorder %s8, 0
    %p28 = por %p26, %p27
    %p29 = scmp.ne.s32.totalorder %s18, %s21
    %p30 = scmp.eq.s32.totalorder %s13, 2
    %p31 = por %p29, %p30
    %p32 = scmp.ne.s32.totalorder %s21, %s22
    %p33 = scmp.eq.s32.totalorder %s13, 0
    %p34 = por %p32, %p33
    %p35 = scmp.ne.s32.totalorder %s21, %s22
    %p36 = scmp.eq.s32.totalorder %s14, 2
    %p37 = por %p35, %p36
    %p39 = scmp.ne.s32.totalorder %s22, %s38
    %p40 = scmp.eq.s32.totalorder %s14, 0
    %p41 = por %p39, %p40
    %s43 = sadd.s32 %s42, 1
    %p46 = scmp.eq.s32.totalorder %s8, 2
    %p47 = scmp.ne.s32.totalorder %s42, %s44
    %p48 = scmp.eq.s32.totalorder %s8, 0
    %p49 = por %p47, %p48
    %p50 = scmp.ne.s32.totalorder %s42, %s44
    %p51 = scmp.eq.s32.totalorder %s13, 2
    %p52 = por %p50, %p51
    %p53 = scmp.ne.s32.totalorder %s44, %s45
    %p54 = scmp.eq.s32.totalorder %s13, 0
    %p55 = por %p53, %p54
    %p56 = scmp.ne.s32.totalorder %s44, %s45
    %p57 = scmp.eq.s32.totalorder %s14, 2
    %p58 = por %p56, %p57
    %p60 = scmp.ne.s32.totalorder %s45, %s59
    %p61 = scmp.eq.s32.totalorder %s14, 0
    %p62 = por %p60, %p61
    %s63 = ssub.s32 %s8, %s15
    %p64 = scmp.eq.s32.totalorder %s63, 0
    %s66 = sadd.s32 %s65, 1
    %s67 = scalar_select %p64, %s65, %s66
    %p70 = pneg %p64
    %p71 = scmp.eq.s32.totalorder %s8, 2
    %p72 = por %p70, %p71
    %p73 = scmp.ne.s32.totalorder %s65, %s68
    %p74 = scmp.eq.s32.totalorder %s8, 0
    %p75 = por %p73, %p74
    %p76 = scmp.ne.s32.totalorder %s65, %s68
    %p77 = scmp.eq.s32.totalorder %s13, 2
    %p78 = por %p76, %p77
    %p79 = scmp.ne.s32.totalorder %s68, %s69
    %p80 = scmp.eq.s32.totalorder %s13, 0
    %p81 = por %p79, %p80
    %p82 = scmp.ne.s32.totalorder %s68, %s69
    %p83 = scmp.eq.s32.totalorder %s14, 2
    %p84 = por %p82, %p83
    %p86 = scmp.ne.s32.totalorder %s69, %s85
    %p87 = scmp.eq.s32.totalorder %s14, 0
    %p88 = por %p86, %p87
    %p89 = scmp.le.s32.totalorder 1, %s8
    %p90 = scmp.lt.s32.totalorder %s8, 4
    %p91 = pnand %p89, %p90
    %p92 = pneg %p91
    // Predicated region
    $region9: #{gcn_encoder.4} parent=5 // pred_check
      _
    $region10: #{gcn_encoder.4} parent=5 // pred_check_branch
      %94 = sbr.rel (%p91) target = $region12
    $region11: #{gcn_encoder.4} parent=5 // pred_region
      %s95 = ssub.s32 %s8, 1
      // Predicated region
      $region13: #{gcn_encoder.4} parent=11 // pred_check
        %p96 = pneg %p55
      $region14: #{gcn_encoder.4} parent=11 // pred_check_branch
        %98 = sbr.rel (%p96) target = $region16
      $region15: #{gcn_encoder.4} parent=11 // pred_region
        _
      $region16: #{gcn_encoder.4} parent=11 // pred_fallthru
        _
    $region12: #{gcn_encoder.4} parent=5 // pred_fallthru
      _
    %p99 = scmp.lt.s32.totalorder %s8, 3
    // Predicated region
    $region17: #{gcn_encoder.4} parent=5 // pred_check
      %p100 = pneg %p99
    $region18: #{gcn_encoder.4} parent=5 // pred_check_branch
      %102 = sbr.rel (%p100) target = $region20
    $region19: #{gcn_encoder.4} parent=5 // pred_region
      // Predicated region
      $region21: #{gcn_encoder.4} parent=19 // pred_check
        %p103 = pneg %p28
      $region22: #{gcn_encoder.4} parent=19 // pred_check_branch
        %105 = sbr.rel (%p103) target = $region24
      $region23: #{gcn_encoder.4} parent=19 // pred_region
        %s106 = smul.u32 16, %s8
        %p107 = scmp.lt.s32.totalorder %s106, 47
        %s108 = scalar_select %p107, %s106, 47
        %s109 = smul.addr %s108, 4
        %s110 = scalar_lea.vmem %s0, %s109
        %s111 = smul.u32 16, %s8
      $region24: #{gcn_encoder.4} parent=19 // pred_fallthru
        _
    $region20: #{gcn_encoder.4} parent=5 // pred_fallthru
      _
    %p112 = scmp.le.s32.totalorder 1, %s8
    %p113 = scmp.lt.s32.totalorder %s8, 4
    %p114 = pnand %p112, %p113
    %p115 = pneg %p114
    // Predicated region
    $region25: #{gcn_encoder.4} parent=5 // pred_check
      _
    $region26: #{gcn_encoder.4} parent=5 // pred_check_branch
      %117 = sbr.rel (%p114) target = $region28
    $region27: #{gcn_encoder.4} parent=5 // pred_region
      %s118 = ssub.s32 %s8, 1
      %s119 = smul.u32 16, %s13
      %p120 = scmp.lt.s32.totalorder %s119, 47
      %s121 = scalar_select %p120, %s119, 47
      %s122 = smul.addr %s121, 4
      %s123 = scalar_lea.vmem %s0, %s122
      %p124 = pneg %p34
      %p125 = pneg %p31
      %p126 = pneg %p55
      %p127 = pneg %p52
      %p128 = pneg %p81
      %p129 = pneg %p78
      %s130 = smul.u32 16, %s13
      %p131 = scmp.lt.s32.totalorder %s130, 47
      %s132 = scalar_select %p131, %s130, 47
      %s133 = smul.addr %s132, 4
      %s134 = scalar_lea.vmem %s2, %s133
      %s135 = smul.u32 16, %s13
      %p136 = scmp.lt.s32.totalorder %s135, 47
      %s137 = scalar_select %p136, %s135, 47
      %s138 = smul.addr %s137, 4
      %s139 = scalar_lea.vmem %s0, %s138
      %s140 = smul.u32 16, %s13
      %s141 = smul.u32 16, %s13
      %p142 = scmp.lt.s32.totalorder %s141, 47
      %s143 = scalar_select %p142, %s141, 47
      %s144 = smul.addr %s143, 4
      %s145 = scalar_lea.vmem %s2, %s144
      %s146 = smul.u32 16, %s13
      %v147 = vld [vmem:[%s139] sm:$0xf]
      %v148 = vld [vmem:[%s139 + $0x4] sm:$0xf]
      %v149 = vld [vmem:[%s139 + $0x8] sm:$0xf]
      %v150 = vld [vmem:[%s139 + $0xc] sm:$0xf]
      %v151 = vld [vmem:[%s139 + $0x10] sm:$0xf]
      %v152 = vld [vmem:[%s139 + $0x14] sm:$0xf]
      %v153 = vld [vmem:[%s139 + $0x18] sm:$0xf]
      %v154 = vld [vmem:[%s139 + $0x1c] sm:$0xf]
      %v155 = vld [vmem:[%s139 + $0x20] sm:$0xf]
      %v156 = vld [vmem:[%s139 + $0x24] sm:$0xf]
      %v157 = vld [vmem:[%s139 + $0x28] sm:$0xf]
      %v158 = vld [vmem:[%s139 + $0x2c] sm:$0xf]
      %v159 = vld [vmem:[%s139 + $0x30] sm:$0xf]
      %v160 = vld [vmem:[%s139 + $0x34] sm:$0xf]
      %v161 = vld [vmem:[%s139 + $0x38] sm:$0xf]
      %v162 = vld [vmem:[%s139 + $0x3c] sm:$0xf]
      %v163 = vld [vmem:[%s1] sm:$0xf]
      %v164 = vld [vmem:[%s1 + $0x4] sm:$0xf]
      %v165 = vld [vmem:[%s1 + $0x8] sm:$0xf]
      %v166 = vld [vmem:[%s1 + $0xc] sm:$0xf]
      %v167 = vld [vmem:[%s1 + $0x10] sm:$0xf]
      %v168 = vld [vmem:[%s1 + $0x14] sm:$0xf]
      %v169 = vld [vmem:[%s1 + $0x18] sm:$0xf]
      %v170 = vld [vmem:[%s1 + $0x1c] sm:$0xf]
      %v171 = vld [vmem:[%s1 + $0x20] sm:$0xf]
      %v172 = vld [vmem:[%s1 + $0x24] sm:$0xf]
      %v173 = vld [vmem:[%s1 + $0x28] sm:$0xf]
      %v174 = vld [vmem:[%s1 + $0x2c] sm:$0xf]
      %v175 = vld [vmem:[%s1 + $0x30] sm:$0xf]
      %v176 = vld [vmem:[%s1 + $0x34] sm:$0xf]
      %v177 = vld [vmem:[%s1 + $0x38] sm:$0xf]
      %v178 = vld [vmem:[%s1 + $0x3c] sm:$0xf]
      %v195 = vunpack.c.l.b16 %v147
      %v196 = vunpack.c.l.b16 %v148
      %v197 = vunpack.c.l.b16 %v149
      %v198 = vunpack.c.l.b16 %v150
      %v199 = vunpack.c.l.b16 %v151
      %v200 = vunpack.c.l.b16 %v152
      %v201 = vunpack.c.l.b16 %v153
      %v202 = vunpack.c.l.b16 %v154
      %v203 = vunpack.c.l.b16 %v155
      %v204 = vunpack.c.l.b16 %v156
      %v205 = vunpack.c.l.b16 %v157
      %v206 = vunpack.c.l.b16 %v158
      %v207 = vunpack.c.l.b16 %v159
      %v208 = vunpack.c.l.b16 %v160
      %v209 = vunpack.c.l.b16 %v161
      %v210 = vunpack.c.l.b16 %v162
      %v211 = vpack.c.b16 %v196, %v195
      %v212 = vpack.c.b16 %v198, %v197
      %v213 = vpack.c.b16 %v200, %v199
      %v214 = vpack.c.b16 %v202, %v201
      %v215 = vpack.c.b16 %v204, %v203
      %v216 = vpack.c.b16 %v206, %v205
      %v217 = vpack.c.b16 %v208, %v207
      %v218 = vpack.c.b16 %v210, %v209
      %v243 = vunpack.c.l.b16 %v163
      %v244 = vunpack.c.l.b16 %v164
      %v245 = vunpack.c.l.b16 %v165
      %v246 = vunpack.c.l.b16 %v166
      %v247 = vunpack.c.l.b16 %v167
      %v248 = vunpack.c.l.b16 %v168
      %v249 = vunpack.c.l.b16 %v169
      %v250 = vunpack.c.l.b16 %v170
      %v251 = vunpack.c.l.b16 %v171
      %v252 = vunpack.c.l.b16 %v172
      %v253 = vunpack.c.l.b16 %v173
      %v254 = vunpack.c.l.b16 %v174
      %v255 = vunpack.c.l.b16 %v175
      %v256 = vunpack.c.l.b16 %v176
      %v257 = vunpack.c.l.b16 %v177
      %v258 = vunpack.c.l.b16 %v178
      %v259 = vpack.c.b16 %v244, %v243
      %v260 = vpack.c.b16 %v246, %v245
      %v261 = vpack.c.b16 %v248, %v247
      %v262 = vpack.c.b16 %v250, %v249
      %v263 = vpack.c.b16 %v252, %v251
      %v264 = vpack.c.b16 %v254, %v253
      %v265 = vpack.c.b16 %v256, %v255
      %v266 = vpack.c.b16 %v258, %v257
      %275 = vmatpush.bf16.msra.mxu0 %v266
      %276 = vmatpush.bf16.msra.mxu0 %v265
      %277 = vmatpush.bf16.msra.mxu0 %v264
      %278 = vmatpush.bf16.msra.mxu0 %v263
      %279 = vmatpush.bf16.msra.mxu0 %v262
      %280 = vmatpush.bf16.msra.mxu0 %v261
      %281 = vmatpush.bf16.msra.mxu0 %v260
      %282 = vmatpush.bf16.msra.mxu0 %v259
      %283 = vmatmul.bf16.gmra.mxu0 %v211
      %v284 = vpop.f32.mrf.mxu0
      %v285 = vadd.f32 0.0, %v284
      %v286 = vpop.f32.mrf.mxu0
      %v287 = vadd.f32 0.0, %v286
      %288 = vmatmul.bf16.gmra.mxu0 %v212
      %v289 = vpop.f32.mrf.mxu0
      %v290 = vadd.f32 0.0, %v289
      %v291 = vpop.f32.mrf.mxu0
      %v292 = vadd.f32 0.0, %v291
      %293 = vmatmul.bf16.gmra.mxu0 %v213
      %v294 = vpop.f32.mrf.mxu0
      %v295 = vadd.f32 0.0, %v294
      %v296 = vpop.f32.mrf.mxu0
      %v297 = vadd.f32 0.0, %v296
      %298 = vmatmul.bf16.gmra.mxu0 %v214
      %v299 = vpop.f32.mrf.mxu0
      %v300 = vadd.f32 0.0, %v299
      %v301 = vpop.f32.mrf.mxu0
      %v302 = vadd.f32 0.0, %v301
      %303 = vmatmul.bf16.gmra.mxu0 %v215
      %v304 = vpop.f32.mrf.mxu0
      %v305 = vadd.f32 0.0, %v304
      %v306 = vpop.f32.mrf.mxu0
      %v307 = vadd.f32 0.0, %v306
      %308 = vmatmul.bf16.gmra.mxu0 %v216
      %v309 = vpop.f32.mrf.mxu0
      %v310 = vadd.f32 0.0, %v309
      %v311 = vpop.f32.mrf.mxu0
      %v312 = vadd.f32 0.0, %v311
      %313 = vmatmul.bf16.gmra.mxu0 %v217
      %v314 = vpop.f32.mrf.mxu0
      %v315 = vadd.f32 0.0, %v314
      %v316 = vpop.f32.mrf.mxu0
      %v317 = vadd.f32 0.0, %v316
      %318 = vmatmul.bf16.gmra.mxu0 %v218
      %v319 = vpop.f32.mrf.mxu0
      %v320 = vadd.f32 0.0, %v319
      %v321 = vpop.f32.mrf.mxu0
      %v322 = vadd.f32 0.0, %v321
      %323 = vdwg.mxu0
      %v324 = vpack.c.bf16 %v285, %v285
      %v325 = vpack.c.bf16 %v287, %v287
      %v326 = vpack.c.bf16 %v290, %v290
      %v327 = vpack.c.bf16 %v292, %v292
      %v328 = vpack.c.bf16 %v295, %v295
      %v329 = vpack.c.bf16 %v297, %v297
      %v330 = vpack.c.bf16 %v300, %v300
      %v331 = vpack.c.bf16 %v302, %v302
      %v332 = vpack.c.bf16 %v305, %v305
      %v333 = vpack.c.bf16 %v307, %v307
      %v334 = vpack.c.bf16 %v310, %v310
      %v335 = vpack.c.bf16 %v312, %v312
      %v336 = vpack.c.bf16 %v315, %v315
      %v337 = vpack.c.bf16 %v317, %v317
      %v338 = vpack.c.bf16 %v320, %v320
      %v339 = vpack.c.bf16 %v322, %v322
      %340 = vst [vmem:[%s145] sm:$0xf] %v324
      %341 = vst [vmem:[%s145 + $0x4] sm:$0xf] %v325
      %342 = vst [vmem:[%s145 + $0x8] sm:$0xf] %v326
      %343 = vst [vmem:[%s145 + $0xc] sm:$0xf] %v327
      %344 = vst [vmem:[%s145 + $0x10] sm:$0xf] %v328
      %345 = vst [vmem:[%s145 + $0x14] sm:$0xf] %v329
      %346 = vst [vmem:[%s145 + $0x18] sm:$0xf] %v330
      %347 = vst [vmem:[%s145 + $0x1c] sm:$0xf] %v331
      %348 = vst [vmem:[%s145 + $0x20] sm:$0xf] %v332
      %349 = vst [vmem:[%s145 + $0x24] sm:$0xf] %v333
      %350 = vst [vmem:[%s145 + $0x28] sm:$0xf] %v334
      %351 = vst [vmem:[%s145 + $0x2c] sm:$0xf] %v335
      %352 = vst [vmem:[%s145 + $0x30] sm:$0xf] %v336
      %353 = vst [vmem:[%s145 + $0x34] sm:$0xf] %v337
      %354 = vst [vmem:[%s145 + $0x38] sm:$0xf] %v338
      %355 = vst [vmem:[%s145 + $0x3c] sm:$0xf] %v339
      %s356 = smul.u32 16, %s13
      %p357 = scmp.lt.s32.totalorder %s356, 47
      %s358 = scalar_select %p357, %s356, 47
      %s359 = smul.addr %s358, 4
      %s360 = scalar_lea.vmem %s2, %s359
      // Predicated region
      $region29: #{gcn_encoder.4} parent=27 // pred_check
        %p361 = pneg %p78
      $region30: #{gcn_encoder.4} parent=27 // pred_check_branch
        %363 = sbr.rel (%p361) target = $region32
      $region31: #{gcn_encoder.4} parent=27 // pred_region
        %s364 = smul.u32 16, %s13
      $region32: #{gcn_encoder.4} parent=27 // pred_fallthru
        _
    $region28: #{gcn_encoder.4} parent=5 // pred_fallthru
      _
    %p365 = scmp.le.s32.totalorder 2, %s8
    // Predicated region
    $region33: #{gcn_encoder.4} parent=5 // pred_check
      %p366 = pneg %p365
    $region34: #{gcn_encoder.4} parent=5 // pred_check_branch
      %368 = sbr.rel (%p366) target = $region36
    $region35: #{gcn_encoder.4} parent=5 // pred_region
      %s369 = ssub.s32 %s8, 2
      // Predicated region
      $region37: #{gcn_encoder.4} parent=35 // pred_check
        %p370 = pneg %p84
      $region38: #{gcn_encoder.4} parent=35 // pred_check_branch
        %372 = sbr.rel (%p370) target = $region40
      $region39: #{gcn_encoder.4} parent=35 // pred_region
        %s373 = smul.u32 16, %s14
        %p374 = scmp.lt.s32.totalorder %s373, 47
        %s375 = scalar_select %p374, %s373, 47
        %s376 = smul.addr %s375, 4
        %s377 = scalar_lea.vmem %s2, %s376
      $region40: #{gcn_encoder.4} parent=35 // pred_fallthru
        _
    $region36: #{gcn_encoder.4} parent=5 // pred_fallthru
      _
  $region6: #{gcn_encoder.4} parent=0 // loop_footer
    %s12 = sadd.s32 1, %s8
  $region7: #{gcn_encoder.4} parent=0 // loop_footer_branch
    %7 = sbr.rel target = $region3
  $region8: #{gcn_encoder.4} parent=0 // loop_exit
    _

// kernel: gcn_encoder.5
$region0: #{gcn_encoder.5}
  #allocation0 [shape = 'u32[]', space=smem, size = 0x4, offset = 0x4, fixed_abs, tag = 'smem constant byte address 0x4 - core index']
  #allocation1 [shape = 'u32[72,128]{1,0:T(1,128)}', space=vmem, size = 0x9000, scoped, tag = 'internal scratch']
  #allocation2 [shape = 'f32[128,128]{1,0:T(8,128)}', space=vmem, size = 0x10000, scoped, tag = 'scratch operand']
  %s0 = inlined_call_operand.vmem [shape: bf16[384,384], index: 0, kind: input, shape index: {}]
  %s1 = inlined_call_operand.vmem [shape: bf16[384,128], index: 1, kind: input, shape index: {}]
  %s2 = inlined_call_operand.vmem [shape: f32[1,128], index: 2, kind: input, shape index: {}]
  %s3 = inlined_call_operand.vmem [shape: bf16[384,128], index: 3, kind: output, shape index: {}]
  %s4 = sld [smem:[#allocation0]]
  $region94: #{gcn_encoder.5} parent=0
    _
  %s6 = ssub.s32 1, %s4
  %s7 = scalar_select 0, %s6, %s4
  $region1: #{gcn_encoder.5} parent=0
    #allocation3 [shape = 'u8[65536]{0}', space=vmem, size = 0x10000, scoped, tag = 'input window, operand 0']
    loop: start=0, step=1, limit=11
    $region2: #{gcn_encoder.5} parent=1 // loop_pre_header
      _
    $region3: #{gcn_encoder.5} parent=1 // loop_header
      %s9 = sphi 0, %s13
      %p10 = scmp.ge.s32.totalorder %s9, 11
      %s16 = sphi 0, %s28
      %s17 = sphi 0, %s24
      %s18 = sphi 0, %s16
      %s19 = sphi 0, %s17
      %s20 = sphi 0, %s18
      %s21 = sphi 0, %s19
      %s33 = sphi 0, %s35
      %s36 = sphi 0, %s33
      %s37 = sphi 0, %s36
      %s53 = sphi 0, %s37
      %s59 = sphi 0, %s61
      %s62 = sphi 0, %s59
      %s63 = sphi 0, %s62
      %s79 = sphi 0, %s63
      %s83 = sphi 0, %s83
      %s85 = sphi 0, %s83
      %s86 = sphi 0, %s85
      %s100 = sphi 0, %s86
      %s106 = sphi 0, %s108
      %s109 = sphi 0, %s106
      %s110 = sphi 0, %s109
      %s126 = sphi 0, %s110
    $region4: #{gcn_encoder.5} parent=1 // loop_header_branch
      %12 = sbr.rel (%p10) target = $region8
    $region5: #{gcn_encoder.5} parent=1 // loop_body
      %s14 = ssub.s32 %s9, 1
      %s15 = ssub.s32 %s9, 2
      %s22 = sadd.s32 1, %s17
      %p23 = scmp.ge.s32.totalorder %s22, 3
      %s24 = scalar_select %p23, 0, %s22
      %s25 = sadd.s32 1, %s16
      %s26 = scalar_select %p23, %s25, %s16
      %p27 = scmp.ge.s32.totalorder %s26, 3
      %s28 = scalar_select %p27, 0, %s26
      %s29 = ssub.s32 %s16, %s28
      %s30 = ssub.s32 %s17, %s24
      %s31 = sor.u32 %s29, %s30
      %p32 = scmp.eq.s32.totalorder %s31, 0
      %s34 = sadd.s32 %s33, 1
      %s35 = scalar_select %p32, %s33, %s34
      %p38 = pneg %p32
      %p39 = scmp.eq.s32.totalorder %s9, 8
      %p40 = por %p38, %p39
      %p41 = scmp.ne.s32.totalorder %s33, %s36
      %p42 = scmp.eq.s32.totalorder %s9, 0
      %p43 = por %p41, %p42
      %p44 = scmp.ne.s32.totalorder %s33, %s36
      %p45 = scmp.eq.s32.totalorder %s14, 8
      %p46 = por %p44, %p45
      %p47 = scmp.ne.s32.totalorder %s36, %s37
      %p48 = scmp.eq.s32.totalorder %s14, 0
      %p49 = por %p47, %p48
      %p50 = scmp.ne.s32.totalorder %s36, %s37
      %p51 = scmp.eq.s32.totalorder %s15, 8
      %p52 = por %p50, %p51
      %p54 = scmp.ne.s32.totalorder %s37, %s53
      %p55 = scmp.eq.s32.totalorder %s15, 0
      %p56 = por %p54, %p55
      %s57 = ssub.s32 %s17, %s24
      %p58 = scmp.eq.s32.totalorder %s57, 0
      %s60 = sadd.s32 %s59, 1
      %s61 = scalar_select %p58, %s59, %s60
      %p64 = pneg %p58
      %p65 = scmp.eq.s32.totalorder %s9, 8
      %p66 = por %p64, %p65
      %p67 = scmp.ne.s32.totalorder %s59, %s62
      %p68 = scmp.eq.s32.totalorder %s9, 0
      %p69 = por %p67, %p68
      %p70 = scmp.ne.s32.totalorder %s59, %s62
      %p71 = scmp.eq.s32.totalorder %s14, 8
      %p72 = por %p70, %p71
      %p73 = scmp.ne.s32.totalorder %s62, %s63
      %p74 = scmp.eq.s32.totalorder %s14, 0
      %p75 = por %p73, %p74
      %p76 = scmp.ne.s32.totalorder %s62, %s63
      %p77 = scmp.eq.s32.totalorder %s15, 8
      %p78 = por %p76, %p77
      %p80 = scmp.ne.s32.totalorder %s63, %s79
      %p81 = scmp.eq.s32.totalorder %s15, 0
      %p82 = por %p80, %p81
      %s84 = sadd.s32 %s83, 1
      %p87 = scmp.eq.s32.totalorder %s9, 8
      %p88 = scmp.ne.s32.totalorder %s83, %s85
      %p89 = scmp.eq.s32.totalorder %s9, 0
      %p90 = por %p88, %p89
      %p91 = scmp.ne.s32.totalorder %s83, %s85
      %p92 = scmp.eq.s32.totalorder %s14, 8
      %p93 = por %p91, %p92
      %p94 = scmp.ne.s32.totalorder %s85, %s86
      %p95 = scmp.eq.s32.totalorder %s14, 0
      %p96 = por %p94, %p95
      %p97 = scmp.ne.s32.totalorder %s85, %s86
      %p98 = scmp.eq.s32.totalorder %s15, 8
      %p99 = por %p97, %p98
      %p101 = scmp.ne.s32.totalorder %s86, %s100
      %p102 = scmp.eq.s32.totalorder %s15, 0
      %p103 = por %p101, %p102
      %s104 = ssub.s32 %s16, %s28
      %p105 = scmp.eq.s32.totalorder %s104, 0
      %s107 = sadd.s32 %s106, 1
      %s108 = scalar_select %p105, %s106, %s107
      %p111 = pneg %p105
      %p112 = scmp.eq.s32.totalorder %s9, 8
      %p113 = por %p111, %p112
      %p114 = scmp.ne.s32.totalorder %s106, %s109
      %p115 = scmp.eq.s32.totalorder %s9, 0
      %p116 = por %p114, %p115
      %p117 = scmp.ne.s32.totalorder %s106, %s109
      %p118 = scmp.eq.s32.totalorder %s14, 8
      %p119 = por %p117, %p118
      %p120 = scmp.ne.s32.totalorder %s109, %s110
      %p121 = scmp.eq.s32.totalorder %s14, 0
      %p122 = por %p120, %p121
      %p123 = scmp.ne.s32.totalorder %s109, %s110
      %p124 = scmp.eq.s32.totalorder %s15, 8
      %p125 = por %p123, %p124
      %p127 = scmp.ne.s32.totalorder %s110, %s126
      %p128 = scmp.eq.s32.totalorder %s15, 0
      %p129 = por %p127, %p128
      %p130 = scmp.le.s32.totalorder 1, %s9
      %p131 = scmp.lt.s32.totalorder %s9, 10
      %p132 = pnand %p130, %p131
      %p133 = pneg %p132
      // Predicated region
      $region9: #{gcn_encoder.5} parent=5 // pred_check
        _
      $region10: #{gcn_encoder.5} parent=5 // pred_check_branch
        %135 = sbr.rel (%p132) target = $region12
      $region11: #{gcn_encoder.5} parent=5 // pred_region
        %s136 = ssub.s32 %s9, 1
        // Predicated region
        $region13: #{gcn_encoder.5} parent=11 // pred_check
          %p137 = pneg %p96
        $region14: #{gcn_encoder.5} parent=11 // pred_check_branch
          %139 = sbr.rel (%p137) target = $region16
        $region15: #{gcn_encoder.5} parent=11 // pred_region
          _
        $region16: #{gcn_encoder.5} parent=11 // pred_fallthru
          _
      $region12: #{gcn_encoder.5} parent=5 // pred_fallthru
        _
      %p140 = scmp.lt.s32.totalorder %s9, 9
      // Predicated region
      $region17: #{gcn_encoder.5} parent=5 // pred_check
        %p141 = pneg %p140
      $region18: #{gcn_encoder.5} parent=5 // pred_check_branch
        %143 = sbr.rel (%p141) target = $region20
      $region19: #{gcn_encoder.5} parent=5 // pred_region
        // Predicated region
        $region21: #{gcn_encoder.5} parent=19 // pred_check
          %p144 = pneg %p43
        $region22: #{gcn_encoder.5} parent=19 // pred_check_branch
          %146 = sbr.rel (%p144) target = $region24
        $region23: #{gcn_encoder.5} parent=19 // pred_region
          %s147 = sand.u32 %s33, 1
          %s148 = sand.u32 %s33, 1
          %s149 = smul.addr %s148, 64
          %s150 = scalar_lea.vmem [#allocation3], %s149
          %s151 = smul.u32 16, %s16
          %s152 = smul.addr %s151, 3
          %s153 = sadd.s32 %s17, %s152
          %s154 = smul.addr %s153, 4
          %s155 = scalar_lea.vmem %s0, %s154
          // Predicated region
          $region25: #{gcn_encoder.5} parent=23 // pred_check
            _
          $region26: #{gcn_encoder.5} parent=23 // pred_check_branch
            %157 = sbr.rel (0) target = $region28
          $region27: #{gcn_encoder.5} parent=23 // pred_region
            // Predicated region
            $region29: #{gcn_encoder.5} parent=27 // pred_check
              _
            $region30: #{gcn_encoder.5} parent=27 // pred_check_branch
              %159 = sbr.rel target = $region32
            $region31: #{gcn_encoder.5} parent=27 // pred_region
              // Predicated region
              $region44: #{gcn_encoder.5} parent=31 // pred_check
                _
              $region45: #{gcn_encoder.5} parent=31 // pred_check_branch
                %205 = sbr.rel (0) target = $region47
              $region46: #{gcn_encoder.5} parent=31 // pred_region
                loop: start=0, step=1, limit=1
                $region48: #{gcn_encoder.5} parent=46 // loop_pre_header
                  _
                $region49: #{gcn_encoder.5} parent=46 // loop_header
                  %s207 = sphi 0, %s211
                  %p208 = scmp.ge.s32.totalorder %s207, 1
                  %s212 = sphi %s155, %s155
                  %s213 = sphi %s150, %s150
                $region50: #{gcn_encoder.5} parent=46 // loop_header_branch
                  %210 = sbr.rel (%p208) target = $region54
                $region51: #{gcn_encoder.5} parent=46 // loop_body
                  _
                $region52: #{gcn_encoder.5} parent=46 // loop_footer
                  %s211 = sadd.s32 1, %s207
                $region53: #{gcn_encoder.5} parent=46 // loop_footer_branch
                  %206 = sbr.rel target = $region49
                $region54: #{gcn_encoder.5} parent=46 // loop_exit
                  _
                %s215 = ssub.s32 16, 1
                loop: start=0, step=1, limit=1
                $region55: #{gcn_encoder.5} parent=46 // loop_pre_header
                  _
                $region56: #{gcn_encoder.5} parent=46 // loop_header
                  %s217 = sphi 0, %s221
                  %p218 = scmp.ge.s32.totalorder %s217, 1
                  %s222 = sphi %s155, %s155
                  %s223 = sphi %s150, %s150
                $region57: #{gcn_encoder.5} parent=46 // loop_header_branch
                  %220 = sbr.rel (%p218) target = $region61
                $region58: #{gcn_encoder.5} parent=46 // loop_body
                  %v224 = vld [vmem:[%s222] sm:%s215]
                  %225 = vst [vmem:[%s223] sm:%s215] %v224
                  %v226 = vld [vmem:[%s222 + $0xc] sm:%s215]
                  %227 = vst [vmem:[%s223 + $0x4] sm:%s215] %v226
                  %v228 = vld [vmem:[%s222 + $0x18] sm:%s215]
                  %229 = vst [vmem:[%s223 + $0x8] sm:%s215] %v228
                  %v230 = vld [vmem:[%s222 + $0x24] sm:%s215]
                  %231 = vst [vmem:[%s223 + $0xc] sm:%s215] %v230
                  %v232 = vld [vmem:[%s222 + $0x30] sm:%s215]
                  %233 = vst [vmem:[%s223 + $0x10] sm:%s215] %v232
                  %v234 = vld [vmem:[%s222 + $0x3c] sm:%s215]
                  %235 = vst [vmem:[%s223 + $0x14] sm:%s215] %v234
                  %v236 = vld [vmem:[%s222 + $0x48] sm:%s215]
                  %237 = vst [vmem:[%s223 + $0x18] sm:%s215] %v236
                  %v238 = vld [vmem:[%s222 + $0x54] sm:%s215]
                  %239 = vst [vmem:[%s223 + $0x1c] sm:%s215] %v238
                  %v240 = vld [vmem:[%s222 + $0x60] sm:%s215]
                  %241 = vst [vmem:[%s223 + $0x20] sm:%s215] %v240
                  %v242 = vld [vmem:[%s222 + $0x6c] sm:%s215]
                  %243 = vst [vmem:[%s223 + $0x24] sm:%s215] %v242
                  %v244 = vld [vmem:[%s222 + $0x78] sm:%s215]
                  %245 = vst [vmem:[%s223 + $0x28] sm:%s215] %v244
                  %v246 = vld [vmem:[%s222 + $0x84] sm:%s215]
                  %247 = vst [vmem:[%s223 + $0x2c] sm:%s215] %v246
                  %v248 = vld [vmem:[%s222 + $0x90] sm:%s215]
                  %249 = vst [vmem:[%s223 + $0x30] sm:%s215] %v248
                  %v250 = vld [vmem:[%s222 + $0x9c] sm:%s215]
                  %251 = vst [vmem:[%s223 + $0x34] sm:%s215] %v250
                  %v252 = vld [vmem:[%s222 + $0xa8] sm:%s215]
                  %253 = vst [vmem:[%s223 + $0x38] sm:%s215] %v252
                  %v254 = vld [vmem:[%s222 + $0xb4] sm:%s215]
                  %255 = vst [vmem:[%s223 + $0x3c] sm:%s215] %v254
                $region59: #{gcn_encoder.5} parent=46 // loop_footer
                  %s221 = sadd.s32 1, %s217
                $region60: #{gcn_encoder.5} parent=46 // loop_footer_branch
                  %216 = sbr.rel target = $region56
                $region61: #{gcn_encoder.5} parent=46 // loop_exit
                  _
              $region47: #{gcn_encoder.5} parent=31 // pred_fallthru
                _
            $region32: #{gcn_encoder.5} parent=27 // pred_fallthru
              _
            // Predicated region
            $region33: #{gcn_encoder.5} parent=27 // pred_check
              _
            $region34: #{gcn_encoder.5} parent=27 // pred_check_branch
              %161 = sbr.rel (0) target = $region36
            $region35: #{gcn_encoder.5} parent=27 // pred_region
              %s163 = ssub.s32 16, 1
              loop: start=0, step=1, limit=1
              $region37: #{gcn_encoder.5} parent=35 // loop_pre_header
                _
              $region38: #{gcn_encoder.5} parent=35 // loop_header
                %s165 = sphi 0, %s169
                %p166 = scmp.ge.s32.totalorder %s165, 1
                %s170 = sphi %s155, %s155
                %s171 = sphi %s150, %s150
              $region39: #{gcn_encoder.5} parent=35 // loop_header_branch
                %168 = sbr.rel (%p166) target = $region43
              $region40: #{gcn_encoder.5} parent=35 // loop_body
                %v172 = vld [vmem:[%s170] sm:%s163]
                %173 = vst [vmem:[%s171] sm:%s163] %v172
                %v174 = vld [vmem:[%s170 + $0xc] sm:%s163]
                %175 = vst [vmem:[%s171 + $0x4] sm:%s163] %v174
                %v176 = vld [vmem:[%s170 + $0x18] sm:%s163]
                %177 = vst [vmem:[%s171 + $0x8] sm:%s163] %v176
                %v178 = vld [vmem:[%s170 + $0x24] sm:%s163]
                %179 = vst [vmem:[%s171 + $0xc] sm:%s163] %v178
                %v180 = vld [vmem:[%s170 + $0x30] sm:%s163]
                %181 = vst [vmem:[%s171 + $0x10] sm:%s163] %v180
                %v182 = vld [vmem:[%s170 + $0x3c] sm:%s163]
                %183 = vst [vmem:[%s171 + $0x14] sm:%s163] %v182
                %v184 = vld [vmem:[%s170 + $0x48] sm:%s163]
                %185 = vst [vmem:[%s171 + $0x18] sm:%s163] %v184
                %v186 = vld [vmem:[%s170 + $0x54] sm:%s163]
                %187 = vst [vmem:[%s171 + $0x1c] sm:%s163] %v186
                %v188 = vld [vmem:[%s170 + $0x60] sm:%s163]
                %189 = vst [vmem:[%s171 + $0x20] sm:%s163] %v188
                %v190 = vld [vmem:[%s170 + $0x6c] sm:%s163]
                %191 = vst [vmem:[%s171 + $0x24] sm:%s163] %v190
                %v192 = vld [vmem:[%s170 + $0x78] sm:%s163]
                %193 = vst [vmem:[%s171 + $0x28] sm:%s163] %v192
                %v194 = vld [vmem:[%s170 + $0x84] sm:%s163]
                %195 = vst [vmem:[%s171 + $0x2c] sm:%s163] %v194
                %v196 = vld [vmem:[%s170 + $0x90] sm:%s163]
                %197 = vst [vmem:[%s171 + $0x30] sm:%s163] %v196
                %v198 = vld [vmem:[%s170 + $0x9c] sm:%s163]
                %199 = vst [vmem:[%s171 + $0x34] sm:%s163] %v198
                %v200 = vld [vmem:[%s170 + $0xa8] sm:%s163]
                %201 = vst [vmem:[%s171 + $0x38] sm:%s163] %v200
                %v202 = vld [vmem:[%s170 + $0xb4] sm:%s163]
                %203 = vst [vmem:[%s171 + $0x3c] sm:%s163] %v202
              $region41: #{gcn_encoder.5} parent=35 // loop_footer
                %s169 = sadd.s32 1, %s165
              $region42: #{gcn_encoder.5} parent=35 // loop_footer_branch
                %164 = sbr.rel target = $region38
              $region43: #{gcn_encoder.5} parent=35 // loop_exit
                _
            $region36: #{gcn_encoder.5} parent=27 // pred_fallthru
              _
          $region28: #{gcn_encoder.5} parent=23 // pred_fallthru
            _
          %256 = vnop
        $region24: #{gcn_encoder.5} parent=19 // pred_fallthru
          _
        // Predicated region
        $region62: #{gcn_encoder.5} parent=19 // pred_check
          %p257 = pneg %p69
        $region63: #{gcn_encoder.5} parent=19 // pred_check_branch
          %259 = sbr.rel (%p257) target = $region65
        $region64: #{gcn_encoder.5} parent=19 // pred_region
          %s260 = smul.u32 16, %s17
          %p261 = scmp.lt.s32.totalorder %s260, 47
          %s262 = scalar_select %p261, %s260, 47
          %s263 = smul.addr %s262, 4
          %s264 = scalar_lea.vmem %s1, %s263
          %s265 = smul.u32 16, %s17
        $region65: #{gcn_encoder.5} parent=19 // pred_fallthru
          _
      $region20: #{gcn_encoder.5} parent=5 // pred_fallthru
        _
      %p266 = scmp.le.s32.totalorder 1, %s9
      %p267 = scmp.lt.s32.totalorder %s9, 10
      %p268 = pnand %p266, %p267
      %p269 = pneg %p268
      // Predicated region
      $region66: #{gcn_encoder.5} parent=5 // pred_check
        _
      $region67: #{gcn_encoder.5} parent=5 // pred_check_branch
        %271 = sbr.rel (%p268) target = $region69
      $region68: #{gcn_encoder.5} parent=5 // pred_region
        %s272 = ssub.s32 %s9, 1
        %s273 = sand.u32 %s36, 1
        %s274 = sand.u32 %s36, 1
        %s275 = smul.addr %s274, 64
        %s276 = scalar_lea.vmem [#allocation3], %s275
        // Predicated region
        $region70: #{gcn_encoder.5} parent=68 // pred_check
          %p277 = pneg %p49
        $region71: #{gcn_encoder.5} parent=68 // pred_check_branch
          %279 = sbr.rel (%p277) target = $region73
        $region72: #{gcn_encoder.5} parent=68 // pred_region
          _
        $region73: #{gcn_encoder.5} parent=68 // pred_fallthru
          _
        %s280 = sand.u32 %s36, 1
        %s281 = sand.u32 %s36, 1
        %s282 = smul.addr %s281, 64
        %s283 = scalar_lea.vmem [#allocation3], %s282
        %p284 = pneg %p49
        %p285 = pneg %p46
        %s286 = smul.u32 16, %s19
        %p287 = scmp.lt.s32.totalorder %s286, 47
        %s288 = scalar_select %p287, %s286, 47
        %s289 = smul.addr %s288, 4
        %s290 = scalar_lea.vmem %s1, %s289
        %p291 = pneg %p75
        %p292 = pneg %p72
        %p293 = pneg %p96
        %p294 = pneg %p93
        %p295 = pneg %p122
        %p296 = pneg %p119
        %s297 = smul.u32 16, %s18
        %p298 = scmp.lt.s32.totalorder %s297, 47
        %s299 = scalar_select %p298, %s297, 47
        %s300 = smul.addr %s299, 4
        %s301 = scalar_lea.vmem %s3, %s300
        %s302 = smul.u32 16, %s18
        %s303 = smul.u32 16, %s19
        %p304 = scmp.lt.s32.totalorder %s303, 47
        %s305 = scalar_select %p304, %s303, 47
        %s306 = smul.addr %s305, 4
        %s307 = scalar_lea.vmem %s1, %s306
        %s308 = smul.u32 16, %s19
        %s309 = smul.u32 16, %s18
        %p310 = scmp.lt.s32.totalorder %s309, 47
        %s311 = scalar_select %p310, %s309, 47
        %s312 = smul.addr %s311, 4
        %s313 = scalar_lea.vmem %s3, %s312
        %s314 = smul.u32 16, %s18
        %p315 = scmp.eq.s32.totalorder %s19, 0
        // Predicated region
        $region74: #{gcn_encoder.5} parent=68 // pred_check
          %p316 = pneg %p315
        $region75: #{gcn_encoder.5} parent=68 // pred_check_branch
          %318 = sbr.rel (%p316) target = $region77
        $region76: #{gcn_encoder.5} parent=68 // pred_region
          %319 = vst [vmem:[#allocation2] sm:$0xff] 0.0
          %320 = vst [vmem:[#allocation2 + $0x8] sm:$0xff] 0.0
          %321 = vst [vmem:[#allocation2 + $0x10] sm:$0xff] 0.0
          %322 = vst [vmem:[#allocation2 + $0x18] sm:$0xff] 0.0
          %323 = vst [vmem:[#allocation2 + $0x20] sm:$0xff] 0.0
          %324 = vst [vmem:[#allocation2 + $0x28] sm:$0xff] 0.0
          %325 = vst [vmem:[#allocation2 + $0x30] sm:$0xff] 0.0
          %326 = vst [vmem:[#allocation2 + $0x38] sm:$0xff] 0.0
          %327 = vst [vmem:[#allocation2 + $0x40] sm:$0xff] 0.0
          %328 = vst [vmem:[#allocation2 + $0x48] sm:$0xff] 0.0
          %329 = vst [vmem:[#allocation2 + $0x50] sm:$0xff] 0.0
          %330 = vst [vmem:[#allocation2 + $0x58] sm:$0xff] 0.0
          %331 = vst [vmem:[#allocation2 + $0x60] sm:$0xff] 0.0
          %332 = vst [vmem:[#allocation2 + $0x68] sm:$0xff] 0.0
          %333 = vst [vmem:[#allocation2 + $0x70] sm:$0xff] 0.0
          %334 = vst [vmem:[#allocation2 + $0x78] sm:$0xff] 0.0
        $region77: #{gcn_encoder.5} parent=68 // pred_fallthru
          _
        %v335 = vld [vmem:[#allocation2] sm:$0xff]
        %v336 = vld [vmem:[#allocation2 + $0x8] sm:$0xff]
        %v337 = vld [vmem:[#allocation2 + $0x10] sm:$0xff]
        %v338 = vld [vmem:[#allocation2 + $0x18] sm:$0xff]
        %v339 = vld [vmem:[#allocation2 + $0x20] sm:$0xff]
        %v340 = vld [vmem:[#allocation2 + $0x28] sm:$0xff]
        %v341 = vld [vmem:[#allocation2 + $0x30] sm:$0xff]
        %v342 = vld [vmem:[#allocation2 + $0x38] sm:$0xff]
        %v343 = vld [vmem:[#allocation2 + $0x40] sm:$0xff]
        %v344 = vld [vmem:[#allocation2 + $0x48] sm:$0xff]
        %v345 = vld [vmem:[#allocation2 + $0x50] sm:$0xff]
        %v346 = vld [vmem:[#allocation2 + $0x58] sm:$0xff]
        %v347 = vld [vmem:[#allocation2 + $0x60] sm:$0xff]
        %v348 = vld [vmem:[#allocation2 + $0x68] sm:$0xff]
        %v349 = vld [vmem:[#allocation2 + $0x70] sm:$0xff]
        %v350 = vld [vmem:[#allocation2 + $0x78] sm:$0xff]
        %v351 = vld [vmem:[%s276] sm:$0xf]
        %v352 = vld [vmem:[%s276 + $0x4] sm:$0xf]
        %v353 = vld [vmem:[%s276 + $0x8] sm:$0xf]
        %v354 = vld [vmem:[%s276 + $0xc] sm:$0xf]
        %v355 = vld [vmem:[%s276 + $0x10] sm:$0xf]
        %v356 = vld [vmem:[%s276 + $0x14] sm:$0xf]
        %v357 = vld [vmem:[%s276 + $0x18] sm:$0xf]
        %v358 = vld [vmem:[%s276 + $0x1c] sm:$0xf]
        %v359 = vld [vmem:[%s276 + $0x20] sm:$0xf]
        %v360 = vld [vmem:[%s276 + $0x24] sm:$0xf]
        %v361 = vld [vmem:[%s276 + $0x28] sm:$0xf]
        %v362 = vld [vmem:[%s276 + $0x2c] sm:$0xf]
        %v363 = vld [vmem:[%s276 + $0x30] sm:$0xf]
        %v364 = vld [vmem:[%s276 + $0x34] sm:$0xf]
        %v365 = vld [vmem:[%s276 + $0x38] sm:$0xf]
        %v366 = vld [vmem:[%s276 + $0x3c] sm:$0xf]
        %v367 = vld [vmem:[%s307] sm:$0xf]
        %v368 = vld [vmem:[%s307 + $0x4] sm:$0xf]
        %v369 = vld [vmem:[%s307 + $0x8] sm:$0xf]
        %v370 = vld [vmem:[%s307 + $0xc] sm:$0xf]
        %v371 = vld [vmem:[%s307 + $0x10] sm:$0xf]
        %v372 = vld [vmem:[%s307 + $0x14] sm:$0xf]
        %v373 = vld [vmem:[%s307 + $0x18] sm:$0xf]
        %v374 = vld [vmem:[%s307 + $0x1c] sm:$0xf]
        %v375 = vld [vmem:[%s307 + $0x20] sm:$0xf]
        %v376 = vld [vmem:[%s307 + $0x24] sm:$0xf]
        %v377 = vld [vmem:[%s307 + $0x28] sm:$0xf]
        %v378 = vld [vmem:[%s307 + $0x2c] sm:$0xf]
        %v379 = vld [vmem:[%s307 + $0x30] sm:$0xf]
        %v380 = vld [vmem:[%s307 + $0x34] sm:$0xf]
        %v381 = vld [vmem:[%s307 + $0x38] sm:$0xf]
        %v382 = vld [vmem:[%s307 + $0x3c] sm:$0xf]
        %v399 = vunpack.c.l.b16 %v351
        %v400 = vunpack.c.l.b16 %v352
        %v401 = vunpack.c.l.b16 %v353
        %v402 = vunpack.c.l.b16 %v354
        %v403 = vunpack.c.l.b16 %v355
        %v404 = vunpack.c.l.b16 %v356
        %v405 = vunpack.c.l.b16 %v357
        %v406 = vunpack.c.l.b16 %v358
        %v407 = vunpack.c.l.b16 %v359
        %v408 = vunpack.c.l.b16 %v360
        %v409 = vunpack.c.l.b16 %v361
        %v410 = vunpack.c.l.b16 %v362
        %v411 = vunpack.c.l.b16 %v363
        %v412 = vunpack.c.l.b16 %v364
        %v413 = vunpack.c.l.b16 %v365
        %v414 = vunpack.c.l.b16 %v366
        %v415 = vpack.c.b16 %v400, %v399
        %v416 = vpack.c.b16 %v402, %v401
        %v417 = vpack.c.b16 %v404, %v403
        %v418 = vpack.c.b16 %v406, %v405
        %v419 = vpack.c.b16 %v408, %v407
        %v420 = vpack.c.b16 %v410, %v409
        %v421 = vpack.c.b16 %v412, %v411
        %v422 = vpack.c.b16 %v414, %v413
        %v447 = vunpack.c.l.b16 %v367
        %v448 = vunpack.c.l.b16 %v368
        %v449 = vunpack.c.l.b16 %v369
        %v450 = vunpack.c.l.b16 %v370
        %v451 = vunpack.c.l.b16 %v371
        %v452 = vunpack.c.l.b16 %v372
        %v453 = vunpack.c.l.b16 %v373
        %v454 = vunpack.c.l.b16 %v374
        %v455 = vunpack.c.l.b16 %v375
        %v456 = vunpack.c.l.b16 %v376
        %v457 = vunpack.c.l.b16 %v377
        %v458 = vunpack.c.l.b16 %v378
        %v459 = vunpack.c.l.b16 %v379
        %v460 = vunpack.c.l.b16 %v380
        %v461 = vunpack.c.l.b16 %v381
        %v462 = vunpack.c.l.b16 %v382
        %v463 = vpack.c.b16 %v448, %v447
        %v464 = vpack.c.b16 %v450, %v449
        %v465 = vpack.c.b16 %v452, %v451
        %v466 = vpack.c.b16 %v454, %v453
        %v467 = vpack.c.b16 %v456, %v455
        %v468 = vpack.c.b16 %v458, %v457
        %v469 = vpack.c.b16 %v460, %v459
        %v470 = vpack.c.b16 %v462, %v461
        %479 = vmatpush.bf16.msra.mxu0 %v470
        %480 = vmatpush.bf16.msra.mxu0 %v469
        %481 = vmatpush.bf16.msra.mxu0 %v468
        %482 = vmatpush.bf16.msra.mxu0 %v467
        %483 = vmatpush.bf16.msra.mxu0 %v466
        %484 = vmatpush.bf16.msra.mxu0 %v465
        %485 = vmatpush.bf16.msra.mxu0 %v464
        %486 = vmatpush.bf16.msra.mxu0 %v463
        %487 = vmatmul.bf16.gmra.mxu0 %v415
        %v488 = vpop.f32.mrf.mxu0
        %v489 = vadd.f32 0.0, %v488
        %v490 = vpop.f32.mrf.mxu0
        %v491 = vadd.f32 0.0, %v490
        %492 = vmatmul.bf16.gmra.mxu0 %v416
        %v493 = vpop.f32.mrf.mxu0
        %v494 = vadd.f32 0.0, %v493
        %v495 = vpop.f32.mrf.mxu0
        %v496 = vadd.f32 0.0, %v495
        %497 = vmatmul.bf16.gmra.mxu0 %v417
        %v498 = vpop.f32.mrf.mxu0
        %v499 = vadd.f32 0.0, %v498
        %v500 = vpop.f32.mrf.mxu0
        %v501 = vadd.f32 0.0, %v500
        %502 = vmatmul.bf16.gmra.mxu0 %v418
        %v503 = vpop.f32.mrf.mxu0
        %v504 = vadd.f32 0.0, %v503
        %v505 = vpop.f32.mrf.mxu0
        %v506 = vadd.f32 0.0, %v505
        %507 = vmatmul.bf16.gmra.mxu0 %v419
        %v508 = vpop.f32.mrf.mxu0
        %v509 = vadd.f32 0.0, %v508
        %v510 = vpop.f32.mrf.mxu0
        %v511 = vadd.f32 0.0, %v510
        %512 = vmatmul.bf16.gmra.mxu0 %v420
        %v513 = vpop.f32.mrf.mxu0
        %v514 = vadd.f32 0.0, %v513
        %v515 = vpop.f32.mrf.mxu0
        %v516 = vadd.f32 0.0, %v515
        %517 = vmatmul.bf16.gmra.mxu0 %v421
        %v518 = vpop.f32.mrf.mxu0
        %v519 = vadd.f32 0.0, %v518
        %v520 = vpop.f32.mrf.mxu0
        %v521 = vadd.f32 0.0, %v520
        %522 = vmatmul.bf16.gmra.mxu0 %v422
        %v523 = vpop.f32.mrf.mxu0
        %v524 = vadd.f32 0.0, %v523
        %v525 = vpop.f32.mrf.mxu0
        %v526 = vadd.f32 0.0, %v525
        %527 = vdwg.mxu0
        %v528 = vadd.f32 %v335, %v489
        %v529 = vadd.f32 %v336, %v491
        %v530 = vadd.f32 %v337, %v494
        %v531 = vadd.f32 %v338, %v496
        %v532 = vadd.f32 %v339, %v499
        %v533 = vadd.f32 %v340, %v501
        %v534 = vadd.f32 %v341, %v504
        %v535 = vadd.f32 %v342, %v506
        %v536 = vadd.f32 %v343, %v509
        %v537 = vadd.f32 %v344, %v511
        %v538 = vadd.f32 %v345, %v514
        %v539 = vadd.f32 %v346, %v516
        %v540 = vadd.f32 %v347, %v519
        %v541 = vadd.f32 %v348, %v521
        %v542 = vadd.f32 %v349, %v524
        %v543 = vadd.f32 %v350, %v526
        %544 = vst [vmem:[#allocation2] sm:$0xff] %v528
        %545 = vst [vmem:[#allocation2 + $0x8] sm:$0xff] %v529
        %546 = vst [vmem:[#allocation2 + $0x10] sm:$0xff] %v530
        %547 = vst [vmem:[#allocation2 + $0x18] sm:$0xff] %v531
        %548 = vst [vmem:[#allocation2 + $0x20] sm:$0xff] %v532
        %549 = vst [vmem:[#allocation2 + $0x28] sm:$0xff] %v533
        %550 = vst [vmem:[#allocation2 + $0x30] sm:$0xff] %v534
        %551 = vst [vmem:[#allocation2 + $0x38] sm:$0xff] %v535
        %552 = vst [vmem:[#allocation2 + $0x40] sm:$0xff] %v536
        %553 = vst [vmem:[#allocation2 + $0x48] sm:$0xff] %v537
        %554 = vst [vmem:[#allocation2 + $0x50] sm:$0xff] %v538
        %555 = vst [vmem:[#allocation2 + $0x58] sm:$0xff] %v539
        %556 = vst [vmem:[#allocation2 + $0x60] sm:$0xff] %v540
        %557 = vst [vmem:[#allocation2 + $0x68] sm:$0xff] %v541
        %558 = vst [vmem:[#allocation2 + $0x70] sm:$0xff] %v542
        %559 = vst [vmem:[#allocation2 + $0x78] sm:$0xff] %v543
        %p560 = scmp.eq.s32.totalorder %s19, 2
        // Predicated region
        $region78: #{gcn_encoder.5} parent=68 // pred_check
          %p561 = pneg %p560
        $region79: #{gcn_encoder.5} parent=68 // pred_check_branch
          %563 = sbr.rel (%p561) target = $region81
        $region80: #{gcn_encoder.5} parent=68 // pred_region
          %v564 = vld [vmem:[#allocation2] sm:$0xff]
          %v565 = vld [vmem:[#allocation2 + $0x8] sm:$0xff]
          %v566 = vld [vmem:[#allocation2 + $0x10] sm:$0xff]
          %v567 = vld [vmem:[#allocation2 + $0x18] sm:$0xff]
          %v568 = vld [vmem:[#allocation2 + $0x20] sm:$0xff]
          %v569 = vld [vmem:[#allocation2 + $0x28] sm:$0xff]
          %v570 = vld [vmem:[#allocation2 + $0x30] sm:$0xff]
          %v571 = vld [vmem:[#allocation2 + $0x38] sm:$0xff]
          %v572 = vld [vmem:[#allocation2 + $0x40] sm:$0xff]
          %v573 = vld [vmem:[#allocation2 + $0x48] sm:$0xff]
          %v574 = vld [vmem:[#allocation2 + $0x50] sm:$0xff]
          %v575 = vld [vmem:[#allocation2 + $0x58] sm:$0xff]
          %v576 = vld [vmem:[#allocation2 + $0x60] sm:$0xff]
          %v577 = vld [vmem:[#allocation2 + $0x68] sm:$0xff]
          %v578 = vld [vmem:[#allocation2 + $0x70] sm:$0xff]
          %v579 = vld [vmem:[#allocation2 + $0x78] sm:$0xff]
          %v580 = vld [vmem:[%s2] sm:$0x1]
          %v582 = vperm.slane %v580, 0
          %v584 = vadd.f32 %v564, %v582
          %v585 = vadd.f32 %v565, %v582
          %v586 = vadd.f32 %v566, %v582
          %v587 = vadd.f32 %v567, %v582
          %v588 = vadd.f32 %v568, %v582
          %v589 = vadd.f32 %v569, %v582
          %v590 = vadd.f32 %v570, %v582
          %v591 = vadd.f32 %v571, %v582
          %v592 = vadd.f32 %v572, %v582
          %v593 = vadd.f32 %v573, %v582
          %v594 = vadd.f32 %v574, %v582
          %v595 = vadd.f32 %v575, %v582
          %v596 = vadd.f32 %v576, %v582
          %v597 = vadd.f32 %v577, %v582
          %v598 = vadd.f32 %v578, %v582
          %v599 = vadd.f32 %v579, %v582
          %v600 = vmax.f32 %v584, 0.0
          %v601 = vmax.f32 %v585, 0.0
          %v602 = vmax.f32 %v586, 0.0
          %v603 = vmax.f32 %v587, 0.0
          %v604 = vmax.f32 %v588, 0.0
          %v605 = vmax.f32 %v589, 0.0
          %v606 = vmax.f32 %v590, 0.0
          %v607 = vmax.f32 %v591, 0.0
          %v608 = vmax.f32 %v592, 0.0
          %v609 = vmax.f32 %v593, 0.0
          %v610 = vmax.f32 %v594, 0.0
          %v611 = vmax.f32 %v595, 0.0
          %v612 = vmax.f32 %v596, 0.0
          %v613 = vmax.f32 %v597, 0.0
          %v614 = vmax.f32 %v598, 0.0
          %v615 = vmax.f32 %v599, 0.0
          %v616 = vpack.c.bf16 %v600, %v600
          %v617 = vpack.c.bf16 %v601, %v601
          %v618 = vpack.c.bf16 %v602, %v602
          %v619 = vpack.c.bf16 %v603, %v603
          %v620 = vpack.c.bf16 %v604, %v604
          %v621 = vpack.c.bf16 %v605, %v605
          %v622 = vpack.c.bf16 %v606, %v606
          %v623 = vpack.c.bf16 %v607, %v607
          %v624 = vpack.c.bf16 %v608, %v608
          %v625 = vpack.c.bf16 %v609, %v609
          %v626 = vpack.c.bf16 %v610, %v610
          %v627 = vpack.c.bf16 %v611, %v611
          %v628 = vpack.c.bf16 %v612, %v612
          %v629 = vpack.c.bf16 %v613, %v613
          %v630 = vpack.c.bf16 %v614, %v614
          %v631 = vpack.c.bf16 %v615, %v615
          %632 = vst [vmem:[%s313] sm:$0xf] %v616
          %633 = vst [vmem:[%s313 + $0x4] sm:$0xf] %v617
          %634 = vst [vmem:[%s313 + $0x8] sm:$0xf] %v618
          %635 = vst [vmem:[%s313 + $0xc] sm:$0xf] %v619
          %636 = vst [vmem:[%s313 + $0x10] sm:$0xf] %v620
          %637 = vst [vmem:[%s313 + $0x14] sm:$0xf] %v621
          %638 = vst [vmem:[%s313 + $0x18] sm:$0xf] %v622
          %639 = vst [vmem:[%s313 + $0x1c] sm:$0xf] %v623
          %640 = vst [vmem:[%s313 + $0x20] sm:$0xf] %v624
          %641 = vst [vmem:[%s313 + $0x24] sm:$0xf] %v625
          %642 = vst [vmem:[%s313 + $0x28] sm:$0xf] %v626
          %643 = vst [vmem:[%s313 + $0x2c] sm:$0xf] %v627
          %644 = vst [vmem:[%s313 + $0x30] sm:$0xf] %v628
          %645 = vst [vmem:[%s313 + $0x34] sm:$0xf] %v629
          %646 = vst [vmem:[%s313 + $0x38] sm:$0xf] %v630
          %647 = vst [vmem:[%s313 + $0x3c] sm:$0xf] %v631
        $region81: #{gcn_encoder.5} parent=68 // pred_fallthru
          _
        %s648 = smul.u32 16, %s18
        %p649 = scmp.lt.s32.totalorder %s648, 47
        %s650 = scalar_select %p649, %s648, 47
        %s651 = smul.addr %s650, 4
        %s652 = scalar_lea.vmem %s3, %s651
        // Predicated region
        $region82: #{gcn_encoder.5} parent=68 // pred_check
          %p653 = pneg %p119
        $region83: #{gcn_encoder.5} parent=68 // pred_check_branch
          %655 = sbr.rel (%p653) target = $region85
        $region84: #{gcn_encoder.5} parent=68 // pred_region
          %s656 = smul.u32 16, %s18
        $region85: #{gcn_encoder.5} parent=68 // pred_fallthru
          _
      $region69: #{gcn_encoder.5} parent=5 // pred_fallthru
        _
      %p657 = scmp.le.s32.totalorder 2, %s9
      // Predicated region
      $region86: #{gcn_encoder.5} parent=5 // pred_check
        %p658 = pneg %p657
      $region87: #{gcn_encoder.5} parent=5 // pred_check_branch
        %660 = sbr.rel (%p658) target = $region89
      $region88: #{gcn_encoder.5} parent=5 // pred_region
        %s661 = ssub.s32 %s9, 2
        // Predicated region
        $region90: #{gcn_encoder.5} parent=88 // pred_check
          %p662 = pneg %p125
        $region91: #{gcn_encoder.5} parent=88 // pred_check_branch
          %664 = sbr.rel (%p662) target = $region93
        $region92: #{gcn_encoder.5} parent=88 // pred_region
          %s665 = smul.u32 16, %s20
          %p666 = scmp.lt.s32.totalorder %s665, 47
          %s667 = scalar_select %p666, %s665, 47
          %s668 = smul.addr %s667, 4
          %s669 = scalar_lea.vmem %s3, %s668
        $region93: #{gcn_encoder.5} parent=88 // pred_fallthru
          _
      $region89: #{gcn_encoder.5} parent=5 // pred_fallthru
        _
    $region6: #{gcn_encoder.5} parent=1 // loop_footer
      %s13 = sadd.s32 1, %s9
    $region7: #{gcn_encoder.5} parent=1 // loop_footer_branch
      %8 = sbr.rel target = $region3
    $region8: #{gcn_encoder.5} parent=1 // loop_exit
      _

// kernel: gcn_encoder.7
$region0: #{gcn_encoder.7}
  #allocation0 [shape = 'u32[]', space=smem, size = 0x4, offset = 0x4, fixed_abs, tag = 'smem constant byte address 0x4 - core index']
  #allocation1 [shape = 'u32[72,128]{1,0:T(1,128)}', space=vmem, size = 0x9000, scoped, tag = 'internal scratch']
  #allocation2 [shape = 'f32[128,128]{1,0:T(8,128)}', space=vmem, size = 0x10000, scoped, tag = 'scratch operand']
  %s0 = inlined_call_operand.vmem [shape: bf16[384,384], index: 0, kind: input, shape index: {}]
  %s1 = inlined_call_operand.vmem [shape: bf16[384,128], index: 1, kind: input, shape index: {}]
  %s2 = inlined_call_operand.vmem [shape: f32[1,128], index: 2, kind: input, shape index: {}]
  %s3 = inlined_call_operand.vmem [shape: f32[384,128], index: 3, kind: output, shape index: {}]
  %s4 = sld [smem:[#allocation0]]
  $region94: #{gcn_encoder.7} parent=0
    _
  %s6 = ssub.s32 1, %s4
  %s7 = scalar_select 0, %s6, %s4
  $region1: #{gcn_encoder.7} parent=0
    #allocation3 [shape = 'u8[65536]{0}', space=vmem, size = 0x10000, scoped, tag = 'input window, operand 0']
    loop: start=0, step=1, limit=11
    $region2: #{gcn_encoder.7} parent=1 // loop_pre_header
      _
    $region3: #{gcn_encoder.7} parent=1 // loop_header
      %s9 = sphi 0, %s13
      %p10 = scmp.ge.s32.totalorder %s9, 11
      %s16 = sphi 0, %s28
      %s17 = sphi 0, %s24
      %s18 = sphi 0, %s16
      %s19 = sphi 0, %s17
      %s20 = sphi 0, %s18
      %s21 = sphi 0, %s19
      %s33 = sphi 0, %s35
      %s36 = sphi 0, %s33
      %s37 = sphi 0, %s36
      %s53 = sphi 0, %s37
      %s59 = sphi 0, %s61
      %s62 = sphi 0, %s59
      %s63 = sphi 0, %s62
      %s79 = sphi 0, %s63
      %s83 = sphi 0, %s83
      %s85 = sphi 0, %s83
      %s86 = sphi 0, %s85
      %s100 = sphi 0, %s86
      %s106 = sphi 0, %s108
      %s109 = sphi 0, %s106
      %s110 = sphi 0, %s109
      %s126 = sphi 0, %s110
    $region4: #{gcn_encoder.7} parent=1 // loop_header_branch
      %12 = sbr.rel (%p10) target = $region8
    $region5: #{gcn_encoder.7} parent=1 // loop_body
      %s14 = ssub.s32 %s9, 1
      %s15 = ssub.s32 %s9, 2
      %s22 = sadd.s32 1, %s17
      %p23 = scmp.ge.s32.totalorder %s22, 3
      %s24 = scalar_select %p23, 0, %s22
      %s25 = sadd.s32 1, %s16
      %s26 = scalar_select %p23, %s25, %s16
      %p27 = scmp.ge.s32.totalorder %s26, 3
      %s28 = scalar_select %p27, 0, %s26
      %s29 = ssub.s32 %s16, %s28
      %s30 = ssub.s32 %s17, %s24
      %s31 = sor.u32 %s29, %s30
      %p32 = scmp.eq.s32.totalorder %s31, 0
      %s34 = sadd.s32 %s33, 1
      %s35 = scalar_select %p32, %s33, %s34
      %p38 = pneg %p32
      %p39 = scmp.eq.s32.totalorder %s9, 8
      %p40 = por %p38, %p39
      %p41 = scmp.ne.s32.totalorder %s33, %s36
      %p42 = scmp.eq.s32.totalorder %s9, 0
      %p43 = por %p41, %p42
      %p44 = scmp.ne.s32.totalorder %s33, %s36
      %p45 = scmp.eq.s32.totalorder %s14, 8
      %p46 = por %p44, %p45
      %p47 = scmp.ne.s32.totalorder %s36, %s37
      %p48 = scmp.eq.s32.totalorder %s14, 0
      %p49 = por %p47, %p48
      %p50 = scmp.ne.s32.totalorder %s36, %s37
      %p51 = scmp.eq.s32.totalorder %s15, 8
      %p52 = por %p50, %p51
      %p54 = scmp.ne.s32.totalorder %s37, %s53
      %p55 = scmp.eq.s32.totalorder %s15, 0
      %p56 = por %p54, %p55
      %s57 = ssub.s32 %s17, %s24
      %p58 = scmp.eq.s32.totalorder %s57, 0
      %s60 = sadd.s32 %s59, 1
      %s61 = scalar_select %p58, %s59, %s60
      %p64 = pneg %p58
      %p65 = scmp.eq.s32.totalorder %s9, 8
      %p66 = por %p64, %p65
      %p67 = scmp.ne.s32.totalorder %s59, %s62
      %p68 = scmp.eq.s32.totalorder %s9, 0
      %p69 = por %p67, %p68
      %p70 = scmp.ne.s32.totalorder %s59, %s62
      %p71 = scmp.eq.s32.totalorder %s14, 8
      %p72 = por %p70, %p71
      %p73 = scmp.ne.s32.totalorder %s62, %s63
      %p74 = scmp.eq.s32.totalorder %s14, 0
      %p75 = por %p73, %p74
      %p76 = scmp.ne.s32.totalorder %s62, %s63
      %p77 = scmp.eq.s32.totalorder %s15, 8
      %p78 = por %p76, %p77
      %p80 = scmp.ne.s32.totalorder %s63, %s79
      %p81 = scmp.eq.s32.totalorder %s15, 0
      %p82 = por %p80, %p81
      %s84 = sadd.s32 %s83, 1
      %p87 = scmp.eq.s32.totalorder %s9, 8
      %p88 = scmp.ne.s32.totalorder %s83, %s85
      %p89 = scmp.eq.s32.totalorder %s9, 0
      %p90 = por %p88, %p89
      %p91 = scmp.ne.s32.totalorder %s83, %s85
      %p92 = scmp.eq.s32.totalorder %s14, 8
      %p93 = por %p91, %p92
      %p94 = scmp.ne.s32.totalorder %s85, %s86
      %p95 = scmp.eq.s32.totalorder %s14, 0
      %p96 = por %p94, %p95
      %p97 = scmp.ne.s32.totalorder %s85, %s86
      %p98 = scmp.eq.s32.totalorder %s15, 8
      %p99 = por %p97, %p98
      %p101 = scmp.ne.s32.totalorder %s86, %s100
      %p102 = scmp.eq.s32.totalorder %s15, 0
      %p103 = por %p101, %p102
      %s104 = ssub.s32 %s16, %s28
      %p105 = scmp.eq.s32.totalorder %s104, 0
      %s107 = sadd.s32 %s106, 1
      %s108 = scalar_select %p105, %s106, %s107
      %p111 = pneg %p105
      %p112 = scmp.eq.s32.totalorder %s9, 8
      %p113 = por %p111, %p112
      %p114 = scmp.ne.s32.totalorder %s106, %s109
      %p115 = scmp.eq.s32.totalorder %s9, 0
      %p116 = por %p114, %p115
      %p117 = scmp.ne.s32.totalorder %s106, %s109
      %p118 = scmp.eq.s32.totalorder %s14, 8
      %p119 = por %p117, %p118
      %p120 = scmp.ne.s32.totalorder %s109, %s110
      %p121 = scmp.eq.s32.totalorder %s14, 0
      %p122 = por %p120, %p121
      %p123 = scmp.ne.s32.totalorder %s109, %s110
      %p124 = scmp.eq.s32.totalorder %s15, 8
      %p125 = por %p123, %p124
      %p127 = scmp.ne.s32.totalorder %s110, %s126
      %p128 = scmp.eq.s32.totalorder %s15, 0
      %p129 = por %p127, %p128
      %p130 = scmp.le.s32.totalorder 1, %s9
      %p131 = scmp.lt.s32.totalorder %s9, 10
      %p132 = pnand %p130, %p131
      %p133 = pneg %p132
      // Predicated region
      $region9: #{gcn_encoder.7} parent=5 // pred_check
        _
      $region10: #{gcn_encoder.7} parent=5 // pred_check_branch
        %135 = sbr.rel (%p132) target = $region12
      $region11: #{gcn_encoder.7} parent=5 // pred_region
        %s136 = ssub.s32 %s9, 1
        // Predicated region
        $region13: #{gcn_encoder.7} parent=11 // pred_check
          %p137 = pneg %p96
        $region14: #{gcn_encoder.7} parent=11 // pred_check_branch
          %139 = sbr.rel (%p137) target = $region16
        $region15: #{gcn_encoder.7} parent=11 // pred_region
          _
        $region16: #{gcn_encoder.7} parent=11 // pred_fallthru
          _
      $region12: #{gcn_encoder.7} parent=5 // pred_fallthru
        _
      %p140 = scmp.lt.s32.totalorder %s9, 9
      // Predicated region
      $region17: #{gcn_encoder.7} parent=5 // pred_check
        %p141 = pneg %p140
      $region18: #{gcn_encoder.7} parent=5 // pred_check_branch
        %143 = sbr.rel (%p141) target = $region20
      $region19: #{gcn_encoder.7} parent=5 // pred_region
        // Predicated region
        $region21: #{gcn_encoder.7} parent=19 // pred_check
          %p144 = pneg %p43
        $region22: #{gcn_encoder.7} parent=19 // pred_check_branch
          %146 = sbr.rel (%p144) target = $region24
        $region23: #{gcn_encoder.7} parent=19 // pred_region
          %s147 = sand.u32 %s33, 1
          %s148 = sand.u32 %s33, 1
          %s149 = smul.addr %s148, 64
          %s150 = scalar_lea.vmem [#allocation3], %s149
          %s151 = smul.u32 16, %s16
          %s152 = smul.addr %s151, 3
          %s153 = sadd.s32 %s17, %s152
          %s154 = smul.addr %s153, 4
          %s155 = scalar_lea.vmem %s0, %s154
          // Predicated region
          $region25: #{gcn_encoder.7} parent=23 // pred_check
            _
          $region26: #{gcn_encoder.7} parent=23 // pred_check_branch
            %157 = sbr.rel (0) target = $region28
          $region27: #{gcn_encoder.7} parent=23 // pred_region
            // Predicated region
            $region29: #{gcn_encoder.7} parent=27 // pred_check
              _
            $region30: #{gcn_encoder.7} parent=27 // pred_check_branch
              %159 = sbr.rel target = $region32
            $region31: #{gcn_encoder.7} parent=27 // pred_region
              // Predicated region
              $region44: #{gcn_encoder.7} parent=31 // pred_check
                _
              $region45: #{gcn_encoder.7} parent=31 // pred_check_branch
                %205 = sbr.rel (0) target = $region47
              $region46: #{gcn_encoder.7} parent=31 // pred_region
                loop: start=0, step=1, limit=1
                $region48: #{gcn_encoder.7} parent=46 // loop_pre_header
                  _
                $region49: #{gcn_encoder.7} parent=46 // loop_header
                  %s207 = sphi 0, %s211
                  %p208 = scmp.ge.s32.totalorder %s207, 1
                  %s212 = sphi %s155, %s155
                  %s213 = sphi %s150, %s150
                $region50: #{gcn_encoder.7} parent=46 // loop_header_branch
                  %210 = sbr.rel (%p208) target = $region54
                $region51: #{gcn_encoder.7} parent=46 // loop_body
                  _
                $region52: #{gcn_encoder.7} parent=46 // loop_footer
                  %s211 = sadd.s32 1, %s207
                $region53: #{gcn_encoder.7} parent=46 // loop_footer_branch
                  %206 = sbr.rel target = $region49
                $region54: #{gcn_encoder.7} parent=46 // loop_exit
                  _
                %s215 = ssub.s32 16, 1
                loop: start=0, step=1, limit=1
                $region55: #{gcn_encoder.7} parent=46 // loop_pre_header
                  _
                $region56: #{gcn_encoder.7} parent=46 // loop_header
                  %s217 = sphi 0, %s221
                  %p218 = scmp.ge.s32.totalorder %s217, 1
                  %s222 = sphi %s155, %s155
                  %s223 = sphi %s150, %s150
                $region57: #{gcn_encoder.7} parent=46 // loop_header_branch
                  %220 = sbr.rel (%p218) target = $region61
                $region58: #{gcn_encoder.7} parent=46 // loop_body
                  %v224 = vld [vmem:[%s222] sm:%s215]
                  %225 = vst [vmem:[%s223] sm:%s215] %v224
                  %v226 = vld [vmem:[%s222 + $0xc] sm:%s215]
                  %227 = vst [vmem:[%s223 + $0x4] sm:%s215] %v226
                  %v228 = vld [vmem:[%s222 + $0x18] sm:%s215]
                  %229 = vst [vmem:[%s223 + $0x8] sm:%s215] %v228
                  %v230 = vld [vmem:[%s222 + $0x24] sm:%s215]
                  %231 = vst [vmem:[%s223 + $0xc] sm:%s215] %v230
                  %v232 = vld [vmem:[%s222 + $0x30] sm:%s215]
                  %233 = vst [vmem:[%s223 + $0x10] sm:%s215] %v232
                  %v234 = vld [vmem:[%s222 + $0x3c] sm:%s215]
                  %235 = vst [vmem:[%s223 + $0x14] sm:%s215] %v234
                  %v236 = vld [vmem:[%s222 + $0x48] sm:%s215]
                  %237 = vst [vmem:[%s223 + $0x18] sm:%s215] %v236
                  %v238 = vld [vmem:[%s222 + $0x54] sm:%s215]
                  %239 = vst [vmem:[%s223 + $0x1c] sm:%s215] %v238
                  %v240 = vld [vmem:[%s222 + $0x60] sm:%s215]
                  %241 = vst [vmem:[%s223 + $0x20] sm:%s215] %v240
                  %v242 = vld [vmem:[%s222 + $0x6c] sm:%s215]
                  %243 = vst [vmem:[%s223 + $0x24] sm:%s215] %v242
                  %v244 = vld [vmem:[%s222 + $0x78] sm:%s215]
                  %245 = vst [vmem:[%s223 + $0x28] sm:%s215] %v244
                  %v246 = vld [vmem:[%s222 + $0x84] sm:%s215]
                  %247 = vst [vmem:[%s223 + $0x2c] sm:%s215] %v246
                  %v248 = vld [vmem:[%s222 + $0x90] sm:%s215]
                  %249 = vst [vmem:[%s223 + $0x30] sm:%s215] %v248
                  %v250 = vld [vmem:[%s222 + $0x9c] sm:%s215]
                  %251 = vst [vmem:[%s223 + $0x34] sm:%s215] %v250
                  %v252 = vld [vmem:[%s222 + $0xa8] sm:%s215]
                  %253 = vst [vmem:[%s223 + $0x38] sm:%s215] %v252
                  %v254 = vld [vmem:[%s222 + $0xb4] sm:%s215]
                  %255 = vst [vmem:[%s223 + $0x3c] sm:%s215] %v254
                $region59: #{gcn_encoder.7} parent=46 // loop_footer
                  %s221 = sadd.s32 1, %s217
                $region60: #{gcn_encoder.7} parent=46 // loop_footer_branch
                  %216 = sbr.rel target = $region56
                $region61: #{gcn_encoder.7} parent=46 // loop_exit
                  _
              $region47: #{gcn_encoder.7} parent=31 // pred_fallthru
                _
            $region32: #{gcn_encoder.7} parent=27 // pred_fallthru
              _
            // Predicated region
            $region33: #{gcn_encoder.7} parent=27 // pred_check
              _
            $region34: #{gcn_encoder.7} parent=27 // pred_check_branch
              %161 = sbr.rel (0) target = $region36
            $region35: #{gcn_encoder.7} parent=27 // pred_region
              %s163 = ssub.s32 16, 1
              loop: start=0, step=1, limit=1
              $region37: #{gcn_encoder.7} parent=35 // loop_pre_header
                _
              $region38: #{gcn_encoder.7} parent=35 // loop_header
                %s165 = sphi 0, %s169
                %p166 = scmp.ge.s32.totalorder %s165, 1
                %s170 = sphi %s155, %s155
                %s171 = sphi %s150, %s150
              $region39: #{gcn_encoder.7} parent=35 // loop_header_branch
                %168 = sbr.rel (%p166) target = $region43
              $region40: #{gcn_encoder.7} parent=35 // loop_body
                %v172 = vld [vmem:[%s170] sm:%s163]
                %173 = vst [vmem:[%s171] sm:%s163] %v172
                %v174 = vld [vmem:[%s170 + $0xc] sm:%s163]
                %175 = vst [vmem:[%s171 + $0x4] sm:%s163] %v174
                %v176 = vld [vmem:[%s170 + $0x18] sm:%s163]
                %177 = vst [vmem:[%s171 + $0x8] sm:%s163] %v176
                %v178 = vld [vmem:[%s170 + $0x24] sm:%s163]
                %179 = vst [vmem:[%s171 + $0xc] sm:%s163] %v178
                %v180 = vld [vmem:[%s170 + $0x30] sm:%s163]
                %181 = vst [vmem:[%s171 + $0x10] sm:%s163] %v180
                %v182 = vld [vmem:[%s170 + $0x3c] sm:%s163]
                %183 = vst [vmem:[%s171 + $0x14] sm:%s163] %v182
                %v184 = vld [vmem:[%s170 + $0x48] sm:%s163]
                %185 = vst [vmem:[%s171 + $0x18] sm:%s163] %v184
                %v186 = vld [vmem:[%s170 + $0x54] sm:%s163]
                %187 = vst [vmem:[%s171 + $0x1c] sm:%s163] %v186
                %v188 = vld [vmem:[%s170 + $0x60] sm:%s163]
                %189 = vst [vmem:[%s171 + $0x20] sm:%s163] %v188
                %v190 = vld [vmem:[%s170 + $0x6c] sm:%s163]
                %191 = vst [vmem:[%s171 + $0x24] sm:%s163] %v190
                %v192 = vld [vmem:[%s170 + $0x78] sm:%s163]
                %193 = vst [vmem:[%s171 + $0x28] sm:%s163] %v192
                %v194 = vld [vmem:[%s170 + $0x84] sm:%s163]
                %195 = vst [vmem:[%s171 + $0x2c] sm:%s163] %v194
                %v196 = vld [vmem:[%s170 + $0x90] sm:%s163]
                %197 = vst [vmem:[%s171 + $0x30] sm:%s163] %v196
                %v198 = vld [vmem:[%s170 + $0x9c] sm:%s163]
                %199 = vst [vmem:[%s171 + $0x34] sm:%s163] %v198
                %v200 = vld [vmem:[%s170 + $0xa8] sm:%s163]
                %201 = vst [vmem:[%s171 + $0x38] sm:%s163] %v200
                %v202 = vld [vmem:[%s170 + $0xb4] sm:%s163]
                %203 = vst [vmem:[%s171 + $0x3c] sm:%s163] %v202
              $region41: #{gcn_encoder.7} parent=35 // loop_footer
                %s169 = sadd.s32 1, %s165
              $region42: #{gcn_encoder.7} parent=35 // loop_footer_branch
                %164 = sbr.rel target = $region38
              $region43: #{gcn_encoder.7} parent=35 // loop_exit
                _
            $region36: #{gcn_encoder.7} parent=27 // pred_fallthru
              _
          $region28: #{gcn_encoder.7} parent=23 // pred_fallthru
            _
          %256 = vnop
        $region24: #{gcn_encoder.7} parent=19 // pred_fallthru
          _
        // Predicated region
        $region62: #{gcn_encoder.7} parent=19 // pred_check
          %p257 = pneg %p69
        $region63: #{gcn_encoder.7} parent=19 // pred_check_branch
          %259 = sbr.rel (%p257) target = $region65
        $region64: #{gcn_encoder.7} parent=19 // pred_region
          %s260 = smul.u32 16, %s17
          %p261 = scmp.lt.s32.totalorder %s260, 47
          %s262 = scalar_select %p261, %s260, 47
          %s263 = smul.addr %s262, 4
          %s264 = scalar_lea.vmem %s1, %s263
          %s265 = smul.u32 16, %s17
        $region65: #{gcn_encoder.7} parent=19 // pred_fallthru
          _
      $region20: #{gcn_encoder.7} parent=5 // pred_fallthru
        _
      %p266 = scmp.le.s32.totalorder 1, %s9
      %p267 = scmp.lt.s32.totalorder %s9, 10
      %p268 = pnand %p266, %p267
      %p269 = pneg %p268
      // Predicated region
      $region66: #{gcn_encoder.7} parent=5 // pred_check
        _
      $region67: #{gcn_encoder.7} parent=5 // pred_check_branch
        %271 = sbr.rel (%p268) target = $region69
      $region68: #{gcn_encoder.7} parent=5 // pred_region
        %s272 = ssub.s32 %s9, 1
        %s273 = sand.u32 %s36, 1
        %s274 = sand.u32 %s36, 1
        %s275 = smul.addr %s274, 64
        %s276 = scalar_lea.vmem [#allocation3], %s275
        // Predicated region
        $region70: #{gcn_encoder.7} parent=68 // pred_check
          %p277 = pneg %p49
        $region71: #{gcn_encoder.7} parent=68 // pred_check_branch
          %279 = sbr.rel (%p277) target = $region73
        $region72: #{gcn_encoder.7} parent=68 // pred_region
          _
        $region73: #{gcn_encoder.7} parent=68 // pred_fallthru
          _
        %s280 = sand.u32 %s36, 1
        %s281 = sand.u32 %s36, 1
        %s282 = smul.addr %s281, 64
        %s283 = scalar_lea.vmem [#allocation3], %s282
        %p284 = pneg %p49
        %p285 = pneg %p46
        %s286 = smul.u32 16, %s19
        %p287 = scmp.lt.s32.totalorder %s286, 47
        %s288 = scalar_select %p287, %s286, 47
        %s289 = smul.addr %s288, 4
        %s290 = scalar_lea.vmem %s1, %s289
        %p291 = pneg %p75
        %p292 = pneg %p72
        %p293 = pneg %p96
        %p294 = pneg %p93
        %p295 = pneg %p122
        %p296 = pneg %p119
        %s297 = smul.u32 16, %s18
        %p298 = scmp.lt.s32.totalorder %s297, 47
        %s299 = scalar_select %p298, %s297, 47
        %s300 = smul.addr %s299, 8
        %s301 = scalar_lea.vmem %s3, %s300
        %s302 = smul.u32 16, %s18
        %s303 = smul.u32 16, %s19
        %p304 = scmp.lt.s32.totalorder %s303, 47
        %s305 = scalar_select %p304, %s303, 47
        %s306 = smul.addr %s305, 4
        %s307 = scalar_lea.vmem %s1, %s306
        %s308 = smul.u32 16, %s19
        %s309 = smul.u32 16, %s18
        %p310 = scmp.lt.s32.totalorder %s309, 47
        %s311 = scalar_select %p310, %s309, 47
        %s312 = smul.addr %s311, 8
        %s313 = scalar_lea.vmem %s3, %s312
        %s314 = smul.u32 16, %s18
        %p315 = scmp.eq.s32.totalorder %s19, 0
        // Predicated region
        $region74: #{gcn_encoder.7} parent=68 // pred_check
          %p316 = pneg %p315
        $region75: #{gcn_encoder.7} parent=68 // pred_check_branch
          %318 = sbr.rel (%p316) target = $region77
        $region76: #{gcn_encoder.7} parent=68 // pred_region
          %319 = vst [vmem:[#allocation2] sm:$0xff] 0.0
          %320 = vst [vmem:[#allocation2 + $0x8] sm:$0xff] 0.0
          %321 = vst [vmem:[#allocation2 + $0x10] sm:$0xff] 0.0
          %322 = vst [vmem:[#allocation2 + $0x18] sm:$0xff] 0.0
          %323 = vst [vmem:[#allocation2 + $0x20] sm:$0xff] 0.0
          %324 = vst [vmem:[#allocation2 + $0x28] sm:$0xff] 0.0
          %325 = vst [vmem:[#allocation2 + $0x30] sm:$0xff] 0.0
          %326 = vst [vmem:[#allocation2 + $0x38] sm:$0xff] 0.0
          %327 = vst [vmem:[#allocation2 + $0x40] sm:$0xff] 0.0
          %328 = vst [vmem:[#allocation2 + $0x48] sm:$0xff] 0.0
          %329 = vst [vmem:[#allocation2 + $0x50] sm:$0xff] 0.0
          %330 = vst [vmem:[#allocation2 + $0x58] sm:$0xff] 0.0
          %331 = vst [vmem:[#allocation2 + $0x60] sm:$0xff] 0.0
          %332 = vst [vmem:[#allocation2 + $0x68] sm:$0xff] 0.0
          %333 = vst [vmem:[#allocation2 + $0x70] sm:$0xff] 0.0
          %334 = vst [vmem:[#allocation2 + $0x78] sm:$0xff] 0.0
        $region77: #{gcn_encoder.7} parent=68 // pred_fallthru
          _
        %v335 = vld [vmem:[#allocation2] sm:$0xff]
        %v336 = vld [vmem:[#allocation2 + $0x8] sm:$0xff]
        %v337 = vld [vmem:[#allocation2 + $0x10] sm:$0xff]
        %v338 = vld [vmem:[#allocation2 + $0x18] sm:$0xff]
        %v339 = vld [vmem:[#allocation2 + $0x20] sm:$0xff]
        %v340 = vld [vmem:[#allocation2 + $0x28] sm:$0xff]
        %v341 = vld [vmem:[#allocation2 + $0x30] sm:$0xff]
        %v342 = vld [vmem:[#allocation2 + $0x38] sm:$0xff]
        %v343 = vld [vmem:[#allocation2 + $0x40] sm:$0xff]
        %v344 = vld [vmem:[#allocation2 + $0x48] sm:$0xff]
        %v345 = vld [vmem:[#allocation2 + $0x50] sm:$0xff]
        %v346 = vld [vmem:[#allocation2 + $0x58] sm:$0xff]
        %v347 = vld [vmem:[#allocation2 + $0x60] sm:$0xff]
        %v348 = vld [vmem:[#allocation2 + $0x68] sm:$0xff]
        %v349 = vld [vmem:[#allocation2 + $0x70] sm:$0xff]
        %v350 = vld [vmem:[#allocation2 + $0x78] sm:$0xff]
        %v351 = vld [vmem:[%s276] sm:$0xf]
        %v352 = vld [vmem:[%s276 + $0x4] sm:$0xf]
        %v353 = vld [vmem:[%s276 + $0x8] sm:$0xf]
        %v354 = vld [vmem:[%s276 + $0xc] sm:$0xf]
        %v355 = vld [vmem:[%s276 + $0x10] sm:$0xf]
        %v356 = vld [vmem:[%s276 + $0x14] sm:$0xf]
        %v357 = vld [vmem:[%s276 + $0x18] sm:$0xf]
        %v358 = vld [vmem:[%s276 + $0x1c] sm:$0xf]
        %v359 = vld [vmem:[%s276 + $0x20] sm:$0xf]
        %v360 = vld [vmem:[%s276 + $0x24] sm:$0xf]
        %v361 = vld [vmem:[%s276 + $0x28] sm:$0xf]
        %v362 = vld [vmem:[%s276 + $0x2c] sm:$0xf]
        %v363 = vld [vmem:[%s276 + $0x30] sm:$0xf]
        %v364 = vld [vmem:[%s276 + $0x34] sm:$0xf]
        %v365 = vld [vmem:[%s276 + $0x38] sm:$0xf]
        %v366 = vld [vmem:[%s276 + $0x3c] sm:$0xf]
        %v367 = vld [vmem:[%s307] sm:$0xf]
        %v368 = vld [vmem:[%s307 + $0x4] sm:$0xf]
        %v369 = vld [vmem:[%s307 + $0x8] sm:$0xf]
        %v370 = vld [vmem:[%s307 + $0xc] sm:$0xf]
        %v371 = vld [vmem:[%s307 + $0x10] sm:$0xf]
        %v372 = vld [vmem:[%s307 + $0x14] sm:$0xf]
        %v373 = vld [vmem:[%s307 + $0x18] sm:$0xf]
        %v374 = vld [vmem:[%s307 + $0x1c] sm:$0xf]
        %v375 = vld [vmem:[%s307 + $0x20] sm:$0xf]
        %v376 = vld [vmem:[%s307 + $0x24] sm:$0xf]
        %v377 = vld [vmem:[%s307 + $0x28] sm:$0xf]
        %v378 = vld [vmem:[%s307 + $0x2c] sm:$0xf]
        %v379 = vld [vmem:[%s307 + $0x30] sm:$0xf]
        %v380 = vld [vmem:[%s307 + $0x34] sm:$0xf]
        %v381 = vld [vmem:[%s307 + $0x38] sm:$0xf]
        %v382 = vld [vmem:[%s307 + $0x3c] sm:$0xf]
        %v399 = vunpack.c.l.b16 %v351
        %v400 = vunpack.c.l.b16 %v352
        %v401 = vunpack.c.l.b16 %v353
        %v402 = vunpack.c.l.b16 %v354
        %v403 = vunpack.c.l.b16 %v355
        %v404 = vunpack.c.l.b16 %v356
        %v405 = vunpack.c.l.b16 %v357
        %v406 = vunpack.c.l.b16 %v358
        %v407 = vunpack.c.l.b16 %v359
        %v408 = vunpack.c.l.b16 %v360
        %v409 = vunpack.c.l.b16 %v361
        %v410 = vunpack.c.l.b16 %v362
        %v411 = vunpack.c.l.b16 %v363
        %v412 = vunpack.c.l.b16 %v364
        %v413 = vunpack.c.l.b16 %v365
        %v414 = vunpack.c.l.b16 %v366
        %v415 = vpack.c.b16 %v400, %v399
        %v416 = vpack.c.b16 %v402, %v401
        %v417 = vpack.c.b16 %v404, %v403
        %v418 = vpack.c.b16 %v406, %v405
        %v419 = vpack.c.b16 %v408, %v407
        %v420 = vpack.c.b16 %v410, %v409
        %v421 = vpack.c.b16 %v412, %v411
        %v422 = vpack.c.b16 %v414, %v413
        %v447 = vunpack.c.l.b16 %v367
        %v448 = vunpack.c.l.b16 %v368
        %v449 = vunpack.c.l.b16 %v369
        %v450 = vunpack.c.l.b16 %v370
        %v451 = vunpack.c.l.b16 %v371
        %v452 = vunpack.c.l.b16 %v372
        %v453 = vunpack.c.l.b16 %v373
        %v454 = vunpack.c.l.b16 %v374
        %v455 = vunpack.c.l.b16 %v375
        %v456 = vunpack.c.l.b16 %v376
        %v457 = vunpack.c.l.b16 %v377
        %v458 = vunpack.c.l.b16 %v378
        %v459 = vunpack.c.l.b16 %v379
        %v460 = vunpack.c.l.b16 %v380
        %v461 = vunpack.c.l.b16 %v381
        %v462 = vunpack.c.l.b16 %v382
        %v463 = vpack.c.b16 %v448, %v447
        %v464 = vpack.c.b16 %v450, %v449
        %v465 = vpack.c.b16 %v452, %v451
        %v466 = vpack.c.b16 %v454, %v453
        %v467 = vpack.c.b16 %v456, %v455
        %v468 = vpack.c.b16 %v458, %v457
        %v469 = vpack.c.b16 %v460, %v459
        %v470 = vpack.c.b16 %v462, %v461
        %479 = vmatpush.bf16.msra.mxu0 %v470
        %480 = vmatpush.bf16.msra.mxu0 %v469
        %481 = vmatpush.bf16.msra.mxu0 %v468
        %482 = vmatpush.bf16.msra.mxu0 %v467
        %483 = vmatpush.bf16.msra.mxu0 %v466
        %484 = vmatpush.bf16.msra.mxu0 %v465
        %485 = vmatpush.bf16.msra.mxu0 %v464
        %486 = vmatpush.bf16.msra.mxu0 %v463
        %487 = vmatmul.bf16.gmra.mxu0 %v415
        %v488 = vpop.f32.mrf.mxu0
        %v489 = vadd.f32 0.0, %v488
        %v490 = vpop.f32.mrf.mxu0
        %v491 = vadd.f32 0.0, %v490
        %492 = vmatmul.bf16.gmra.mxu0 %v416
        %v493 = vpop.f32.mrf.mxu0
        %v494 = vadd.f32 0.0, %v493
        %v495 = vpop.f32.mrf.mxu0
        %v496 = vadd.f32 0.0, %v495
        %497 = vmatmul.bf16.gmra.mxu0 %v417
        %v498 = vpop.f32.mrf.mxu0
        %v499 = vadd.f32 0.0, %v498
        %v500 = vpop.f32.mrf.mxu0
        %v501 = vadd.f32 0.0, %v500
        %502 = vmatmul.bf16.gmra.mxu0 %v418
        %v503 = vpop.f32.mrf.mxu0
        %v504 = vadd.f32 0.0, %v503
        %v505 = vpop.f32.mrf.mxu0
        %v506 = vadd.f32 0.0, %v505
        %507 = vmatmul.bf16.gmra.mxu0 %v419
        %v508 = vpop.f32.mrf.mxu0
        %v509 = vadd.f32 0.0, %v508
        %v510 = vpop.f32.mrf.mxu0
        %v511 = vadd.f32 0.0, %v510
        %512 = vmatmul.bf16.gmra.mxu0 %v420
        %v513 = vpop.f32.mrf.mxu0
        %v514 = vadd.f32 0.0, %v513
        %v515 = vpop.f32.mrf.mxu0
        %v516 = vadd.f32 0.0, %v515
        %517 = vmatmul.bf16.gmra.mxu0 %v421
        %v518 = vpop.f32.mrf.mxu0
        %v519 = vadd.f32 0.0, %v518
        %v520 = vpop.f32.mrf.mxu0
        %v521 = vadd.f32 0.0, %v520
        %522 = vmatmul.bf16.gmra.mxu0 %v422
        %v523 = vpop.f32.mrf.mxu0
        %v524 = vadd.f32 0.0, %v523
        %v525 = vpop.f32.mrf.mxu0
        %v526 = vadd.f32 0.0, %v525
        %527 = vdwg.mxu0
        %v528 = vadd.f32 %v335, %v489
        %v529 = vadd.f32 %v336, %v491
        %v530 = vadd.f32 %v337, %v494
        %v531 = vadd.f32 %v338, %v496
        %v532 = vadd.f32 %v339, %v499
        %v533 = vadd.f32 %v340, %v501
        %v534 = vadd.f32 %v341, %v504
        %v535 = vadd.f32 %v342, %v506
        %v536 = vadd.f32 %v343, %v509
        %v537 = vadd.f32 %v344, %v511
        %v538 = vadd.f32 %v345, %v514
        %v539 = vadd.f32 %v346, %v516
        %v540 = vadd.f32 %v347, %v519
        %v541 = vadd.f32 %v348, %v521
        %v542 = vadd.f32 %v349, %v524
        %v543 = vadd.f32 %v350, %v526
        %544 = vst [vmem:[#allocation2] sm:$0xff] %v528
        %545 = vst [vmem:[#allocation2 + $0x8] sm:$0xff] %v529
        %546 = vst [vmem:[#allocation2 + $0x10] sm:$0xff] %v530
        %547 = vst [vmem:[#allocation2 + $0x18] sm:$0xff] %v531
        %548 = vst [vmem:[#allocation2 + $0x20] sm:$0xff] %v532
        %549 = vst [vmem:[#allocation2 + $0x28] sm:$0xff] %v533
        %550 = vst [vmem:[#allocation2 + $0x30] sm:$0xff] %v534
        %551 = vst [vmem:[#allocation2 + $0x38] sm:$0xff] %v535
        %552 = vst [vmem:[#allocation2 + $0x40] sm:$0xff] %v536
        %553 = vst [vmem:[#allocation2 + $0x48] sm:$0xff] %v537
        %554 = vst [vmem:[#allocation2 + $0x50] sm:$0xff] %v538
        %555 = vst [vmem:[#allocation2 + $0x58] sm:$0xff] %v539
        %556 = vst [vmem:[#allocation2 + $0x60] sm:$0xff] %v540
        %557 = vst [vmem:[#allocation2 + $0x68] sm:$0xff] %v541
        %558 = vst [vmem:[#allocation2 + $0x70] sm:$0xff] %v542
        %559 = vst [vmem:[#allocation2 + $0x78] sm:$0xff] %v543
        %p560 = scmp.eq.s32.totalorder %s19, 2
        // Predicated region
        $region78: #{gcn_encoder.7} parent=68 // pred_check
          %p561 = pneg %p560
        $region79: #{gcn_encoder.7} parent=68 // pred_check_branch
          %563 = sbr.rel (%p561) target = $region81
        $region80: #{gcn_encoder.7} parent=68 // pred_region
          %v564 = vld [vmem:[#allocation2] sm:$0xff]
          %v565 = vld [vmem:[#allocation2 + $0x8] sm:$0xff]
          %v566 = vld [vmem:[#allocation2 + $0x10] sm:$0xff]
          %v567 = vld [vmem:[#allocation2 + $0x18] sm:$0xff]
          %v568 = vld [vmem:[#allocation2 + $0x20] sm:$0xff]
          %v569 = vld [vmem:[#allocation2 + $0x28] sm:$0xff]
          %v570 = vld [vmem:[#allocation2 + $0x30] sm:$0xff]
          %v571 = vld [vmem:[#allocation2 + $0x38] sm:$0xff]
          %v572 = vld [vmem:[#allocation2 + $0x40] sm:$0xff]
          %v573 = vld [vmem:[#allocation2 + $0x48] sm:$0xff]
          %v574 = vld [vmem:[#allocation2 + $0x50] sm:$0xff]
          %v575 = vld [vmem:[#allocation2 + $0x58] sm:$0xff]
          %v576 = vld [vmem:[#allocation2 + $0x60] sm:$0xff]
          %v577 = vld [vmem:[#allocation2 + $0x68] sm:$0xff]
          %v578 = vld [vmem:[#allocation2 + $0x70] sm:$0xff]
          %v579 = vld [vmem:[#allocation2 + $0x78] sm:$0xff]
          %v580 = vld [vmem:[%s2] sm:$0x1]
          %v582 = vperm.slane %v580, 0
          %v584 = vadd.f32 %v564, %v582
          %v585 = vadd.f32 %v565, %v582
          %v586 = vadd.f32 %v566, %v582
          %v587 = vadd.f32 %v567, %v582
          %v588 = vadd.f32 %v568, %v582
          %v589 = vadd.f32 %v569, %v582
          %v590 = vadd.f32 %v570, %v582
          %v591 = vadd.f32 %v571, %v582
          %v592 = vadd.f32 %v572, %v582
          %v593 = vadd.f32 %v573, %v582
          %v594 = vadd.f32 %v574, %v582
          %v595 = vadd.f32 %v575, %v582
          %v596 = vadd.f32 %v576, %v582
          %v597 = vadd.f32 %v577, %v582
          %v598 = vadd.f32 %v578, %v582
          %v599 = vadd.f32 %v579, %v582
          %600 = vst [vmem:[%s313] sm:$0xff] %v584
          %601 = vst [vmem:[%s313 + $0x8] sm:$0xff] %v585
          %602 = vst [vmem:[%s313 + $0x10] sm:$0xff] %v586
          %603 = vst [vmem:[%s313 + $0x18] sm:$0xff] %v587
          %604 = vst [vmem:[%s313 + $0x20] sm:$0xff] %v588
          %605 = vst [vmem:[%s313 + $0x28] sm:$0xff] %v589
          %606 = vst [vmem:[%s313 + $0x30] sm:$0xff] %v590
          %607 = vst [vmem:[%s313 + $0x38] sm:$0xff] %v591
          %608 = vst [vmem:[%s313 + $0x40] sm:$0xff] %v592
          %609 = vst [vmem:[%s313 + $0x48] sm:$0xff] %v593
          %610 = vst [vmem:[%s313 + $0x50] sm:$0xff] %v594
          %611 = vst [vmem:[%s313 + $0x58] sm:$0xff] %v595
          %612 = vst [vmem:[%s313 + $0x60] sm:$0xff] %v596
          %613 = vst [vmem:[%s313 + $0x68] sm:$0xff] %v597
          %614 = vst [vmem:[%s313 + $0x70] sm:$0xff] %v598
          %615 = vst [vmem:[%s313 + $0x78] sm:$0xff] %v599
        $region81: #{gcn_encoder.7} parent=68 // pred_fallthru
          _
        %s616 = smul.u32 16, %s18
        %p617 = scmp.lt.s32.totalorder %s616, 47
        %s618 = scalar_select %p617, %s616, 47
        %s619 = smul.addr %s618, 8
        %s620 = scalar_lea.vmem %s3, %s619
        // Predicated region
        $region82: #{gcn_encoder.7} parent=68 // pred_check
          %p621 = pneg %p119
        $region83: #{gcn_encoder.7} parent=68 // pred_check_branch
          %623 = sbr.rel (%p621) target = $region85
        $region84: #{gcn_encoder.7} parent=68 // pred_region
          %s624 = smul.u32 16, %s18
        $region85: #{gcn_encoder.7} parent=68 // pred_fallthru
          _
      $region69: #{gcn_encoder.7} parent=5 // pred_fallthru
        _
      %p625 = scmp.le.s32.totalorder 2, %s9
      // Predicated region
      $region86: #{gcn_encoder.7} parent=5 // pred_check
        %p626 = pneg %p625
      $region87: #{gcn_encoder.7} parent=5 // pred_check_branch
        %628 = sbr.rel (%p626) target = $region89
      $region88: #{gcn_encoder.7} parent=5 // pred_region
        %s629 = ssub.s32 %s9, 2
        // Predicated region
        $region90: #{gcn_encoder.7} parent=88 // pred_check
          %p630 = pneg %p125
        $region91: #{gcn_encoder.7} parent=88 // pred_check_branch
          %632 = sbr.rel (%p630) target = $region93
        $region92: #{gcn_encoder.7} parent=88 // pred_region
          %s633 = smul.u32 16, %s20
          %p634 = scmp.lt.s32.totalorder %s633, 47
          %s635 = scalar_select %p634, %s633, 47
          %s636 = smul.addr %s635, 8
          %s637 = scalar_lea.vmem %s3, %s636
        $region93: #{gcn_encoder.7} parent=88 // pred_fallthru
          _
      $region89: #{gcn_encoder.7} parent=5 // pred_fallthru
        _
    $region6: #{gcn_encoder.7} parent=1 // loop_footer
      %s13 = sadd.s32 1, %s9
    $region7: #{gcn_encoder.7} parent=1 // loop_footer_branch
      %8 = sbr.rel target = $region3
    $region8: #{gcn_encoder.7} parent=1 // loop_exit
      _

</llo_original>
